<compile_context>
chip_gen: v7x
topology: tpu7x:2x2x1
jax: 0.10.0
libtpu: 0.0.40
codegen_flags: <defaults>
</compile_context>

<pallas_src>
import numpy as np

import jax
import jax.numpy as jnp
from jax import lax
from jax.experimental import pallas as pl
from jax.experimental.pallas import tpu as pltpu


def _tap_masks(H, W, K, block_n):
    """0/1 masks (K*K, 1, block_n*H*W): 1 where the shifted tap stays inside
    its own image (also kills cross-image leakage when batch is in the lane axis)."""
    P = K // 2
    HW = H * W
    m = np.zeros((K * K, 1, HW), np.float32)
    for kh in range(K):
        for kw in range(K):
            dh, dw = kh - P, kw - P
            plane = np.zeros((H, W), np.float32)
            h0, h1 = max(0, -dh), min(H, H - dh)
            w0, w1 = max(0, -dw), min(W, W - dw)
            plane[h0:h1, w0:w1] = 1.0
            m[kh * K + kw, 0, :] = plane.reshape(-1)
    return np.tile(m, (1, 1, block_n))


def _make_kernel(C, H, W, K, L, compute_dtype):
    P = K // 2
    taps = [(kh - P, kw - P) for kh in range(K) for kw in range(K)]

    def conv(act, w_ref, mask_ref):
        # act: (C, L) f32; w_ref: (C, K*K*C) compute_dtype; mask_ref: (K*K, 1, L).
        # Build the stacked, masked-shifted activation (K*K*C, L), then ONE dot.
        slabs = []
        for t, (dh, dw) in enumerate(taps):
            shift = dh * W + dw
            if shift == 0:
                slabs.append(act)  # center tap: mask is all ones
            else:
                # roll so slab[:, p] = act[:, p + shift]; wrapped / row-crossing /
                # image-crossing elements are zeroed by the halo mask
                # (== Conv2d zero padding).
                slabs.append(pltpu.roll(act, (-shift) % L, axis=1) * mask_ref[t])
        xs = jnp.concatenate(slabs, axis=0).astype(compute_dtype)  # (K*K*C, L)
        return jnp.dot(w_ref[...], xs, preferred_element_type=jnp.float32)

    def kernel(x_ref, w1_ref, w2_ref, mask_ref, bn_ref, o_ref):
        x = x_ref[...].astype(jnp.float32)                      # (C, L)
        bn = bn_ref[...]                                        # (C, 4) f32
        s1, b1 = bn[:, 0:1], bn[:, 1:2]
        s2, b2 = bn[:, 2:3], bn[:, 3:4]
        a1 = jnp.maximum(x * s1 + b1, 0.0)                      # BN1 + ReLU (f32)
        c1 = conv(a1, w1_ref, mask_ref)                         # conv1 (single MXU dot)
        a2 = jnp.maximum(c1 * s2 + b2, 0.0)                     # BN2 + ReLU (f32)
        c2 = conv(a2, w2_ref, mask_ref)                         # conv2 (single MXU dot)
        o_ref[...] = (x + c2).astype(o_ref.dtype)               # identity skip

    return kernel


def residual_unit_2d(x, w1, w2, gamma1, beta1, mean1, var1,
                     gamma2, beta2, mean2, var2, eps=1e-5,
                     block_n=None, compute_dtype=jnp.bfloat16):
    """x: (N, C, H, W) float32; w1, w2: (C, C, K, K) OIHW conv weights."""
    N, C, H, W = x.shape
    C_out, C_in, K, _ = w1.shape
    assert C_in == C and C_out == C and w2.shape == (C, C, K, K), (
        "stride=1 case -> Identity skip requires matching channel counts")
    HW = H * W

    if block_n is None:
        # ~1 MiB of activations per grid step; keep >=2 grid steps so the
        # "parallel" batch axis can feed both TensorCores on v7x.
        per_img_bytes = C * HW * 4
        block_n = max(1, min(N, (1 << 20) // max(per_img_bytes, 1)))
        if N >= 2:
            block_n = max(1, min(block_n, N // 2))
        while N % block_n:
            block_n -= 1
    assert N % block_n == 0
    L = block_n * HW  # lane-dense per-step width (multiple of 128 when HW is)

    # Fold BatchNorm (inference mode) into per-channel scale/shift; pack the
    # four (C,) vectors into a single (C, 4) tensor -> one small DMA.
    s1 = (gamma1 / jnp.sqrt(var1 + eps)).astype(jnp.float32)
    b1 = (beta1 - mean1 * s1).astype(jnp.float32)
    s2 = (gamma2 / jnp.sqrt(var2 + eps)).astype(jnp.float32)
    b2 = (beta2 - mean2 * s2).astype(jnp.float32)
    bn = jnp.stack([s1, b1, s2, b2], axis=1)                    # (C, 4)

    # Stacked im2col weights: w_s[co, t*C + ci] = w[co, ci, kh, kw], t = kh*K+kw.
    w1_s = jnp.transpose(w1, (0, 2, 3, 1)).reshape(C, K * K * C).astype(compute_dtype)
    w2_s = jnp.transpose(w2, (0, 2, 3, 1)).reshape(C, K * K * C).astype(compute_dtype)

    masks = jnp.asarray(_tap_masks(H, W, K, block_n))           # (K*K, 1, L) f32

    # Channel-major, lane-dense activation layout: (C, N*H*W).
    x_cm = jnp.transpose(x, (1, 0, 2, 3)).reshape(C, N * HW)

    kernel = _make_kernel(C, H, W, K, L, compute_dtype)

    def build_call(single_buffer_consts):
        def const_spec(shape, idx):
            if single_buffer_consts:
                # Constant-index inputs are fetched once; don't double-buffer them.
                return pl.BlockSpec(shape, idx, pipeline_mode=pl.Buffered(1))
            return pl.BlockSpec(shape, idx)

        return pl.pallas_call(
            kernel,
            out_shape=jax.ShapeDtypeStruct((C, N * HW), x.dtype),
            grid_spec=pltpu.PrefetchScalarGridSpec(
                num_scalar_prefetch=0,
                grid=(N // block_n,),
                in_specs=[
                    pl.BlockSpec((C, L), lambda b: (0, b)),            # x (double-buffered)
                    const_spec((C, K * K * C), lambda b: (0, 0)),      # conv1 weights
                    const_spec((C, K * K * C), lambda b: (0, 0)),      # conv2 weights
                    const_spec((K * K, 1, L), lambda b: (0, 0, 0)),    # halo masks
                    const_spec((C, 4), lambda b: (0, 0)),              # packed BN scale/shift
                ],
                out_specs=pl.BlockSpec((C, L), lambda b: (0, b)),
            ),
            compiler_params=pltpu.CompilerParams(
                dimension_semantics=("parallel",),     # batch axis -> both TCs on v7x
                vmem_limit_bytes=32 * 1024 * 1024),    # fits v7x's 64 MiB physical VMEM
        )

    try:
        out = build_call(True)(x_cm, w1_s, w2_s, masks, bn)
    except Exception:
        # Fallback for JAX versions where single-buffered pipeline_mode isn't
        # supported on a plain pallas_call; only costs a bit of extra VMEM.
        out = build_call(False)(x_cm, w1_s, w2_s, masks, bn)

    return jnp.transpose(out.reshape(C, N, H, W), (1, 0, 2, 3))


def _reference(x, w1, w2, s1, b1, s2, b2):
    """Pure-JAX reference (NCHW, OIHW), same folded-BN semantics."""
    P = w1.shape[2] // 2
    dn = lax.conv_dimension_numbers(x.shape, w1.shape, ('NCHW', 'OIHW', 'NCHW'))

    def bn_relu(v, s, b):
        return jnp.maximum(v * s[None, :, None, None] + b[None, :, None, None], 0.0)

    a1 = bn_relu(x, s1, b1)
    c1 = lax.conv_general_dilated(a1, w1, (1, 1), [(P, P), (P, P)],
                                  dimension_numbers=dn)
    a2 = bn_relu(c1, s2, b2)
    c2 = lax.conv_general_dilated(a2, w2, (1, 1), [(P, P), (P, P)],
                                  dimension_numbers=dn)
    return x + c2


if __name__ == "__main__":
    N, C, H, W, K = 2, 4, 16, 16, 3
    eps = 1e-5

    keys = jax.random.split(jax.random.PRNGKey(0), 12)
    x = jax.random.normal(keys[0], (N, C, H, W), jnp.float32)
    w1 = jax.random.normal(keys[1], (C, C, K, K), jnp.float32) * 0.1
    w2 = jax.random.normal(keys[2], (C, C, K, K), jnp.float32) * 0.1
    gamma1 = jax.random.uniform(keys[3], (C,), jnp.float32, 0.5, 1.5)
    beta1 = jax.random.normal(keys[4], (C,), jnp.float32) * 0.1
    mean1 = jax.random.normal(keys[5], (C,), jnp.float32) * 0.1
    var1 = jax.random.uniform(keys[6], (C,), jnp.float32, 0.5, 1.5)
    gamma2 = jax.random.uniform(keys[7], (C,), jnp.float32, 0.5, 1.5)
    beta2 = jax.random.normal(keys[8], (C,), jnp.float32) * 0.1
    mean2 = jax.random.normal(keys[9], (C,), jnp.float32) * 0.1
    var2 = jax.random.uniform(keys[10], (C,), jnp.float32, 0.5, 1.5)

    out = jax.block_until_ready(
        residual_unit_2d(x, w1, w2, gamma1, beta1, mean1, var1,
                         gamma2, beta2, mean2, var2, eps=eps))

    # Verify against pure-JAX reference. bf16 MXU operands with f32 accumulation
    # give O(1e-2) worst-case deviation at these magnitudes; genuine logic errors
    # (shift/mask/weight-layout) produce O(0.1..1) deviations — check max-abs too.
    s1 = gamma1 / jnp.sqrt(var1 + eps)
    b1 = beta1 - mean1 * s1
    s2 = gamma2 / jnp.sqrt(var2 + eps)
    b2 = beta2 - mean2 * s2
    ref = _reference(x, w1, w2, s1, b1, s2, b2)

    assert out.shape == (N, C, H, W), out.shape
    max_abs_err = float(jnp.max(jnp.abs(out - ref)))
    assert max_abs_err < 5e-2, max_abs_err
    assert jnp.allclose(out, ref, rtol=2e-2, atol=2e-2), max_abs_err
    print("KERNEL_OK")
</pallas_src>

<mosaic_0001>
module attributes {stable_mosaic.version = 11 : i64} {
  func.func @kernel(%arg0: i32, %arg1: memref<4x256xf32, #tpu.memory_space<vmem>>, %arg2: memref<4x36xbf16, #tpu.memory_space<vmem>>, %arg3: memref<4x36xbf16, #tpu.memory_space<vmem>>, %arg4: memref<9x1x256xf32, #tpu.memory_space<vmem>>, %arg5: memref<4x4xf32, #tpu.memory_space<vmem>>, %arg6: memref<4x256xf32, #tpu.memory_space<vmem>>) attributes {dimension_semantics = [#tpu.dimension_semantics<parallel>], iteration_bounds = array<i64: 2>, scalar_prefetch = 0 : i64, scratch_operands = 0 : i64, tpu.core_type = #tpu.core_type<tc>, window_params = [{transform_indices = @transform_0, window_bounds = array<i64: 4, 256>}, {pipeline_mode = #tpu.pipeline_mode<synchronous>, transform_indices = @transform_1, window_bounds = array<i64: 4, 36>}, {pipeline_mode = #tpu.pipeline_mode<synchronous>, transform_indices = @transform_2, window_bounds = array<i64: 4, 36>}, {pipeline_mode = #tpu.pipeline_mode<synchronous>, transform_indices = @transform_3, window_bounds = array<i64: 9, 1, 256>}, {pipeline_mode = #tpu.pipeline_mode<synchronous>, transform_indices = @transform_4, window_bounds = array<i64: 4, 4>}, {transform_indices = @transform_5, window_bounds = array<i64: 4, 256>}]} {
    %c0 = arith.constant 0 : index
    %c0_0 = arith.constant 0 : index
    %0 = vector.load %arg1[%c0, %c0_0] : memref<4x256xf32, #tpu.memory_space<vmem>>, vector<4x256xf32>
    %c0_1 = arith.constant 0 : index
    %c0_2 = arith.constant 0 : index
    %1 = vector.load %arg5[%c0_1, %c0_2] : memref<4x4xf32, #tpu.memory_space<vmem>>, vector<4x4xf32>
    %2 = vector.extract_strided_slice %1 {offsets = [0, 0], sizes = [4, 1], strides = [1, 1]} : vector<4x4xf32> to vector<4x1xf32>
    %3 = vector.extract_strided_slice %1 {offsets = [0, 1], sizes = [4, 1], strides = [1, 1]} : vector<4x4xf32> to vector<4x1xf32>
    %4 = vector.extract_strided_slice %1 {offsets = [0, 2], sizes = [4, 1], strides = [1, 1]} : vector<4x4xf32> to vector<4x1xf32>
    %5 = vector.extract_strided_slice %1 {offsets = [0, 3], sizes = [4, 1], strides = [1, 1]} : vector<4x4xf32> to vector<4x1xf32>
    %6 = vector.broadcast %2 : vector<4x1xf32> to vector<4x256xf32>
    %7 = arith.mulf %0, %6 : vector<4x256xf32>
    %8 = vector.broadcast %3 : vector<4x1xf32> to vector<4x256xf32>
    %9 = arith.addf %7, %8 : vector<4x256xf32>
    %cst = arith.constant 0.000000e+00 : f32
    %10 = vector.broadcast %cst : f32 to vector<4x256xf32>
    %11 = arith.maximumf %9, %10 : vector<4x256xf32>
    %c17_i32 = arith.constant 17 : i32
    %12 = tpu.dynamic_rotate %11 by %c17_i32 dim 1 : vector<4x256xf32>, i32 -> vector<4x256xf32>
    %c0_3 = arith.constant 0 : index
    %c0_4 = arith.constant 0 : index
    %c0_5 = arith.constant 0 : index
    %13 = vector.load %arg4[%c0_3, %c0_4, %c0_5] : memref<9x1x256xf32, #tpu.memory_space<vmem>>, vector<1x1x256xf32>
    %14 = vector.shape_cast %13 : vector<1x1x256xf32> to vector<1x256xf32>
    %15 = vector.broadcast %14 : vector<1x256xf32> to vector<4x256xf32>
    %16 = arith.mulf %12, %15 : vector<4x256xf32>
    %c16_i32 = arith.constant 16 : i32
    %17 = tpu.dynamic_rotate %11 by %c16_i32 dim 1 : vector<4x256xf32>, i32 -> vector<4x256xf32>
    %c1 = arith.constant 1 : index
    %c0_6 = arith.constant 0 : index
    %c0_7 = arith.constant 0 : index
    %18 = vector.load %arg4[%c1, %c0_6, %c0_7] : memref<9x1x256xf32, #tpu.memory_space<vmem>>, vector<1x1x256xf32>
    %19 = vector.shape_cast %18 : vector<1x1x256xf32> to vector<1x256xf32>
    %20 = vector.broadcast %19 : vector<1x256xf32> to vector<4x256xf32>
    %21 = arith.mulf %17, %20 : vector<4x256xf32>
    %c15_i32 = arith.constant 15 : i32
    %22 = tpu.dynamic_rotate %11 by %c15_i32 dim 1 : vector<4x256xf32>, i32 -> vector<4x256xf32>
    %c2 = arith.constant 2 : index
    %c0_8 = arith.constant 0 : index
    %c0_9 = arith.constant 0 : index
    %23 = vector.load %arg4[%c2, %c0_8, %c0_9] : memref<9x1x256xf32, #tpu.memory_space<vmem>>, vector<1x1x256xf32>
    %24 = vector.shape_cast %23 : vector<1x1x256xf32> to vector<1x256xf32>
    %25 = vector.broadcast %24 : vector<1x256xf32> to vector<4x256xf32>
    %26 = arith.mulf %22, %25 : vector<4x256xf32>
    %c1_i32 = arith.constant 1 : i32
    %27 = tpu.dynamic_rotate %11 by %c1_i32 dim 1 : vector<4x256xf32>, i32 -> vector<4x256xf32>
    %c3 = arith.constant 3 : index
    %c0_10 = arith.constant 0 : index
    %c0_11 = arith.constant 0 : index
    %28 = vector.load %arg4[%c3, %c0_10, %c0_11] : memref<9x1x256xf32, #tpu.memory_space<vmem>>, vector<1x1x256xf32>
    %29 = vector.shape_cast %28 : vector<1x1x256xf32> to vector<1x256xf32>
    %30 = vector.broadcast %29 : vector<1x256xf32> to vector<4x256xf32>
    %31 = arith.mulf %27, %30 : vector<4x256xf32>
    %c255_i32 = arith.constant 255 : i32
    %32 = tpu.dynamic_rotate %11 by %c255_i32 dim 1 : vector<4x256xf32>, i32 -> vector<4x256xf32>
    %c5 = arith.constant 5 : index
    %c0_12 = arith.constant 0 : index
    %c0_13 = arith.constant 0 : index
    %33 = vector.load %arg4[%c5, %c0_12, %c0_13] : memref<9x1x256xf32, #tpu.memory_space<vmem>>, vector<1x1x256xf32>
    %34 = vector.shape_cast %33 : vector<1x1x256xf32> to vector<1x256xf32>
    %35 = vector.broadcast %34 : vector<1x256xf32> to vector<4x256xf32>
    %36 = arith.mulf %32, %35 : vector<4x256xf32>
    %c241_i32 = arith.constant 241 : i32
    %37 = tpu.dynamic_rotate %11 by %c241_i32 dim 1 : vector<4x256xf32>, i32 -> vector<4x256xf32>
    %c6 = arith.constant 6 : index
    %c0_14 = arith.constant 0 : index
    %c0_15 = arith.constant 0 : index
    %38 = vector.load %arg4[%c6, %c0_14, %c0_15] : memref<9x1x256xf32, #tpu.memory_space<vmem>>, vector<1x1x256xf32>
    %39 = vector.shape_cast %38 : vector<1x1x256xf32> to vector<1x256xf32>
    %40 = vector.broadcast %39 : vector<1x256xf32> to vector<4x256xf32>
    %41 = arith.mulf %37, %40 : vector<4x256xf32>
    %c240_i32 = arith.constant 240 : i32
    %42 = tpu.dynamic_rotate %11 by %c240_i32 dim 1 : vector<4x256xf32>, i32 -> vector<4x256xf32>
    %c7 = arith.constant 7 : index
    %c0_16 = arith.constant 0 : index
    %c0_17 = arith.constant 0 : index
    %43 = vector.load %arg4[%c7, %c0_16, %c0_17] : memref<9x1x256xf32, #tpu.memory_space<vmem>>, vector<1x1x256xf32>
    %44 = vector.shape_cast %43 : vector<1x1x256xf32> to vector<1x256xf32>
    %45 = vector.broadcast %44 : vector<1x256xf32> to vector<4x256xf32>
    %46 = arith.mulf %42, %45 : vector<4x256xf32>
    %c239_i32 = arith.constant 239 : i32
    %47 = tpu.dynamic_rotate %11 by %c239_i32 dim 1 : vector<4x256xf32>, i32 -> vector<4x256xf32>
    %c8 = arith.constant 8 : index
    %c0_18 = arith.constant 0 : index
    %c0_19 = arith.constant 0 : index
    %48 = vector.load %arg4[%c8, %c0_18, %c0_19] : memref<9x1x256xf32, #tpu.memory_space<vmem>>, vector<1x1x256xf32>
    %49 = vector.shape_cast %48 : vector<1x1x256xf32> to vector<1x256xf32>
    %50 = vector.broadcast %49 : vector<1x256xf32> to vector<4x256xf32>
    %51 = arith.mulf %47, %50 : vector<4x256xf32>
    %52 = tpu.concatenate %16, %21, %26, %31, %11, %36, %41, %46, %51 in 0 : vector<4x256xf32>, vector<4x256xf32>, vector<4x256xf32>, vector<4x256xf32>, vector<4x256xf32>, vector<4x256xf32>, vector<4x256xf32>, vector<4x256xf32>, vector<4x256xf32> -> vector<36x256xf32>
    %53 = arith.truncf %52 : vector<36x256xf32> to vector<36x256xbf16>
    %c0_20 = arith.constant 0 : index
    %c0_21 = arith.constant 0 : index
    %54 = vector.load %arg2[%c0_20, %c0_21] : memref<4x36xbf16, #tpu.memory_space<vmem>>, vector<4x36xbf16>
    %cst_22 = arith.constant dense<0.000000e+00> : vector<4x256xf32>
    %55 = tpu.matmul %54, %53, %cst_22 {dimension_numbers = #tpu.dot_dimension_numbers<[1], [0], [0], [1], [0, 0, 1, 1], [], []>} : vector<4x36xbf16>, vector<36x256xbf16>, vector<4x256xf32> -> vector<4x256xf32>
    %56 = vector.broadcast %4 : vector<4x1xf32> to vector<4x256xf32>
    %57 = arith.mulf %55, %56 : vector<4x256xf32>
    %58 = vector.broadcast %5 : vector<4x1xf32> to vector<4x256xf32>
    %59 = arith.addf %57, %58 : vector<4x256xf32>
    %cst_23 = arith.constant 0.000000e+00 : f32
    %60 = vector.broadcast %cst_23 : f32 to vector<4x256xf32>
    %61 = arith.maximumf %59, %60 : vector<4x256xf32>
    %c17_i32_24 = arith.constant 17 : i32
    %62 = tpu.dynamic_rotate %61 by %c17_i32_24 dim 1 : vector<4x256xf32>, i32 -> vector<4x256xf32>
    %c0_25 = arith.constant 0 : index
    %c0_26 = arith.constant 0 : index
    %c0_27 = arith.constant 0 : index
    %63 = vector.load %arg4[%c0_25, %c0_26, %c0_27] : memref<9x1x256xf32, #tpu.memory_space<vmem>>, vector<1x1x256xf32>
    %64 = vector.shape_cast %63 : vector<1x1x256xf32> to vector<1x256xf32>
    %65 = vector.broadcast %64 : vector<1x256xf32> to vector<4x256xf32>
    %66 = arith.mulf %62, %65 : vector<4x256xf32>
    %c16_i32_28 = arith.constant 16 : i32
    %67 = tpu.dynamic_rotate %61 by %c16_i32_28 dim 1 : vector<4x256xf32>, i32 -> vector<4x256xf32>
    %c1_29 = arith.constant 1 : index
    %c0_30 = arith.constant 0 : index
    %c0_31 = arith.constant 0 : index
    %68 = vector.load %arg4[%c1_29, %c0_30, %c0_31] : memref<9x1x256xf32, #tpu.memory_space<vmem>>, vector<1x1x256xf32>
    %69 = vector.shape_cast %68 : vector<1x1x256xf32> to vector<1x256xf32>
    %70 = vector.broadcast %69 : vector<1x256xf32> to vector<4x256xf32>
    %71 = arith.mulf %67, %70 : vector<4x256xf32>
    %c15_i32_32 = arith.constant 15 : i32
    %72 = tpu.dynamic_rotate %61 by %c15_i32_32 dim 1 : vector<4x256xf32>, i32 -> vector<4x256xf32>
    %c2_33 = arith.constant 2 : index
    %c0_34 = arith.constant 0 : index
    %c0_35 = arith.constant 0 : index
    %73 = vector.load %arg4[%c2_33, %c0_34, %c0_35] : memref<9x1x256xf32, #tpu.memory_space<vmem>>, vector<1x1x256xf32>
    %74 = vector.shape_cast %73 : vector<1x1x256xf32> to vector<1x256xf32>
    %75 = vector.broadcast %74 : vector<1x256xf32> to vector<4x256xf32>
    %76 = arith.mulf %72, %75 : vector<4x256xf32>
    %c1_i32_36 = arith.constant 1 : i32
    %77 = tpu.dynamic_rotate %61 by %c1_i32_36 dim 1 : vector<4x256xf32>, i32 -> vector<4x256xf32>
    %c3_37 = arith.constant 3 : index
    %c0_38 = arith.constant 0 : index
    %c0_39 = arith.constant 0 : index
    %78 = vector.load %arg4[%c3_37, %c0_38, %c0_39] : memref<9x1x256xf32, #tpu.memory_space<vmem>>, vector<1x1x256xf32>
    %79 = vector.shape_cast %78 : vector<1x1x256xf32> to vector<1x256xf32>
    %80 = vector.broadcast %79 : vector<1x256xf32> to vector<4x256xf32>
    %81 = arith.mulf %77, %80 : vector<4x256xf32>
    %c255_i32_40 = arith.constant 255 : i32
    %82 = tpu.dynamic_rotate %61 by %c255_i32_40 dim 1 : vector<4x256xf32>, i32 -> vector<4x256xf32>
    %c5_41 = arith.constant 5 : index
    %c0_42 = arith.constant 0 : index
    %c0_43 = arith.constant 0 : index
    %83 = vector.load %arg4[%c5_41, %c0_42, %c0_43] : memref<9x1x256xf32, #tpu.memory_space<vmem>>, vector<1x1x256xf32>
    %84 = vector.shape_cast %83 : vector<1x1x256xf32> to vector<1x256xf32>
    %85 = vector.broadcast %84 : vector<1x256xf32> to vector<4x256xf32>
    %86 = arith.mulf %82, %85 : vector<4x256xf32>
    %c241_i32_44 = arith.constant 241 : i32
    %87 = tpu.dynamic_rotate %61 by %c241_i32_44 dim 1 : vector<4x256xf32>, i32 -> vector<4x256xf32>
    %c6_45 = arith.constant 6 : index
    %c0_46 = arith.constant 0 : index
    %c0_47 = arith.constant 0 : index
    %88 = vector.load %arg4[%c6_45, %c0_46, %c0_47] : memref<9x1x256xf32, #tpu.memory_space<vmem>>, vector<1x1x256xf32>
    %89 = vector.shape_cast %88 : vector<1x1x256xf32> to vector<1x256xf32>
    %90 = vector.broadcast %89 : vector<1x256xf32> to vector<4x256xf32>
    %91 = arith.mulf %87, %90 : vector<4x256xf32>
    %c240_i32_48 = arith.constant 240 : i32
    %92 = tpu.dynamic_rotate %61 by %c240_i32_48 dim 1 : vector<4x256xf32>, i32 -> vector<4x256xf32>
    %c7_49 = arith.constant 7 : index
    %c0_50 = arith.constant 0 : index
    %c0_51 = arith.constant 0 : index
    %93 = vector.load %arg4[%c7_49, %c0_50, %c0_51] : memref<9x1x256xf32, #tpu.memory_space<vmem>>, vector<1x1x256xf32>
    %94 = vector.shape_cast %93 : vector<1x1x256xf32> to vector<1x256xf32>
    %95 = vector.broadcast %94 : vector<1x256xf32> to vector<4x256xf32>
    %96 = arith.mulf %92, %95 : vector<4x256xf32>
    %c239_i32_52 = arith.constant 239 : i32
    %97 = tpu.dynamic_rotate %61 by %c239_i32_52 dim 1 : vector<4x256xf32>, i32 -> vector<4x256xf32>
    %c8_53 = arith.constant 8 : index
    %c0_54 = arith.constant 0 : index
    %c0_55 = arith.constant 0 : index
    %98 = vector.load %arg4[%c8_53, %c0_54, %c0_55] : memref<9x1x256xf32, #tpu.memory_space<vmem>>, vector<1x1x256xf32>
    %99 = vector.shape_cast %98 : vector<1x1x256xf32> to vector<1x256xf32>
    %100 = vector.broadcast %99 : vector<1x256xf32> to vector<4x256xf32>
    %101 = arith.mulf %97, %100 : vector<4x256xf32>
    %102 = tpu.concatenate %66, %71, %76, %81, %61, %86, %91, %96, %101 in 0 : vector<4x256xf32>, vector<4x256xf32>, vector<4x256xf32>, vector<4x256xf32>, vector<4x256xf32>, vector<4x256xf32>, vector<4x256xf32>, vector<4x256xf32>, vector<4x256xf32> -> vector<36x256xf32>
    %103 = arith.truncf %102 : vector<36x256xf32> to vector<36x256xbf16>
    %c0_56 = arith.constant 0 : index
    %c0_57 = arith.constant 0 : index
    %104 = vector.load %arg3[%c0_56, %c0_57] : memref<4x36xbf16, #tpu.memory_space<vmem>>, vector<4x36xbf16>
    %cst_58 = arith.constant dense<0.000000e+00> : vector<4x256xf32>
    %105 = tpu.matmul %104, %103, %cst_58 {dimension_numbers = #tpu.dot_dimension_numbers<[1], [0], [0], [1], [0, 0, 1, 1], [], []>} : vector<4x36xbf16>, vector<36x256xbf16>, vector<4x256xf32> -> vector<4x256xf32>
    %106 = arith.addf %0, %105 : vector<4x256xf32>
    %c0_59 = arith.constant 0 : index
    %c0_60 = arith.constant 0 : index
    %107 = vector.load %arg6[%c0_59, %c0_60] : memref<4x256xf32, #tpu.memory_space<vmem>>, vector<4x256xf32>
    tpu.vector_store %arg6[%c0_59, %c0_60], %106 {strides = array<i32>} : memref<4x256xf32, #tpu.memory_space<vmem>>, vector<4x256xf32>,
    return
  }
  func.func @transform_0(%arg0: i32) -> (i32, i32) {
    %c0_i32 = arith.constant 0 : i32
    %c0_i32_0 = arith.constant 0 : i32
    return %c0_i32, %arg0 : i32, i32
  }
  func.func @transform_1(%arg0: i32) -> (i32, i32) {
    %c0_i32 = arith.constant 0 : i32
    %c0_i32_0 = arith.constant 0 : i32
    %c0_i32_1 = arith.constant 0 : i32
    return %c0_i32, %c0_i32_0 : i32, i32
  }
  func.func @transform_2(%arg0: i32) -> (i32, i32) {
    %c0_i32 = arith.constant 0 : i32
    %c0_i32_0 = arith.constant 0 : i32
    %c0_i32_1 = arith.constant 0 : i32
    return %c0_i32, %c0_i32_0 : i32, i32
  }
  func.func @transform_3(%arg0: i32) -> (i32, i32, i32) {
    %c0_i32 = arith.constant 0 : i32
    %c0_i32_0 = arith.constant 0 : i32
    %c0_i32_1 = arith.constant 0 : i32
    %c0_i32_2 = arith.constant 0 : i32
    return %c0_i32, %c0_i32_0, %c0_i32_1 : i32, i32, i32
  }
  func.func @transform_4(%arg0: i32) -> (i32, i32) {
    %c0_i32 = arith.constant 0 : i32
    %c0_i32_0 = arith.constant 0 : i32
    %c0_i32_1 = arith.constant 0 : i32
    return %c0_i32, %c0_i32_0 : i32, i32
  }
  func.func @transform_5(%arg0: i32) -> (i32, i32) {
    %c0_i32 = arith.constant 0 : i32
    %c0_i32_0 = arith.constant 0 : i32
    return %c0_i32, %arg0 : i32, i32
  }
}

module attributes {stable_mosaic.version = 11 : i64} {
  func.func @kernel(%arg0: i32, %arg1: memref<4x256xf32, #tpu.memory_space<vmem>>, %arg2: memref<4x36xbf16, #tpu.memory_space<vmem>>, %arg3: memref<4x36xbf16, #tpu.memory_space<vmem>>, %arg4: memref<9x1x256xf32, #tpu.memory_space<vmem>>, %arg5: memref<4x4xf32, #tpu.memory_space<vmem>>, %arg6: memref<4x256xf32, #tpu.memory_space<vmem>>) attributes {dimension_semantics = [#tpu.dimension_semantics<parallel>], iteration_bounds = array<i64: 2>, scalar_prefetch = 0 : i64, scratch_operands = 0 : i64, tpu.core_type = #tpu.core_type<tc>, window_params = [{transform_indices = @transform_0, window_bounds = array<i64: 4, 256>}, {pipeline_mode = #tpu.pipeline_mode<synchronous>, transform_indices = @transform_1, window_bounds = array<i64: 4, 36>}, {pipeline_mode = #tpu.pipeline_mode<synchronous>, transform_indices = @transform_2, window_bounds = array<i64: 4, 36>}, {pipeline_mode = #tpu.pipeline_mode<synchronous>, transform_indices = @transform_3, window_bounds = array<i64: 9, 1, 256>}, {pipeline_mode = #tpu.pipeline_mode<synchronous>, transform_indices = @transform_4, window_bounds = array<i64: 4, 4>}, {transform_indices = @transform_5, window_bounds = array<i64: 4, 256>}]} {
    %c0 = arith.constant 0 : index
    %c0_0 = arith.constant 0 : index
    %0 = vector.load %arg1[%c0, %c0_0] : memref<4x256xf32, #tpu.memory_space<vmem>>, vector<4x256xf32>
    %c0_1 = arith.constant 0 : index
    %c0_2 = arith.constant 0 : index
    %1 = vector.load %arg5[%c0_1, %c0_2] : memref<4x4xf32, #tpu.memory_space<vmem>>, vector<4x4xf32>
    %2 = vector.extract_strided_slice %1 {offsets = [0, 0], sizes = [4, 1], strides = [1, 1]} : vector<4x4xf32> to vector<4x1xf32>
    %3 = vector.extract_strided_slice %1 {offsets = [0, 1], sizes = [4, 1], strides = [1, 1]} : vector<4x4xf32> to vector<4x1xf32>
    %4 = vector.extract_strided_slice %1 {offsets = [0, 2], sizes = [4, 1], strides = [1, 1]} : vector<4x4xf32> to vector<4x1xf32>
    %5 = vector.extract_strided_slice %1 {offsets = [0, 3], sizes = [4, 1], strides = [1, 1]} : vector<4x4xf32> to vector<4x1xf32>
    %6 = vector.broadcast %2 : vector<4x1xf32> to vector<4x256xf32>
    %7 = arith.mulf %0, %6 : vector<4x256xf32>
    %8 = vector.broadcast %3 : vector<4x1xf32> to vector<4x256xf32>
    %9 = arith.addf %7, %8 : vector<4x256xf32>
    %cst = arith.constant 0.000000e+00 : f32
    %10 = vector.broadcast %cst : f32 to vector<4x256xf32>
    %11 = arith.maximumf %9, %10 : vector<4x256xf32>
    %c17_i32 = arith.constant 17 : i32
    %12 = tpu.dynamic_rotate %11 by %c17_i32 dim 1 : vector<4x256xf32>, i32 -> vector<4x256xf32>
    %c0_3 = arith.constant 0 : index
    %c0_4 = arith.constant 0 : index
    %c0_5 = arith.constant 0 : index
    %13 = vector.load %arg4[%c0_3, %c0_4, %c0_5] : memref<9x1x256xf32, #tpu.memory_space<vmem>>, vector<1x1x256xf32>
    %14 = vector.shape_cast %13 : vector<1x1x256xf32> to vector<1x256xf32>
    %15 = vector.broadcast %14 : vector<1x256xf32> to vector<4x256xf32>
    %16 = arith.mulf %12, %15 : vector<4x256xf32>
    %c16_i32 = arith.constant 16 : i32
    %17 = tpu.dynamic_rotate %11 by %c16_i32 dim 1 : vector<4x256xf32>, i32 -> vector<4x256xf32>
    %c1 = arith.constant 1 : index
    %c0_6 = arith.constant 0 : index
    %c0_7 = arith.constant 0 : index
    %18 = vector.load %arg4[%c1, %c0_6, %c0_7] : memref<9x1x256xf32, #tpu.memory_space<vmem>>, vector<1x1x256xf32>
    %19 = vector.shape_cast %18 : vector<1x1x256xf32> to vector<1x256xf32>
    %20 = vector.broadcast %19 : vector<1x256xf32> to vector<4x256xf32>
    %21 = arith.mulf %17, %20 : vector<4x256xf32>
    %c15_i32 = arith.constant 15 : i32
    %22 = tpu.dynamic_rotate %11 by %c15_i32 dim 1 : vector<4x256xf32>, i32 -> vector<4x256xf32>
    %c2 = arith.constant 2 : index
    %c0_8 = arith.constant 0 : index
    %c0_9 = arith.constant 0 : index
    %23 = vector.load %arg4[%c2, %c0_8, %c0_9] : memref<9x1x256xf32, #tpu.memory_space<vmem>>, vector<1x1x256xf32>
    %24 = vector.shape_cast %23 : vector<1x1x256xf32> to vector<1x256xf32>
    %25 = vector.broadcast %24 : vector<1x256xf32> to vector<4x256xf32>
    %26 = arith.mulf %22, %25 : vector<4x256xf32>
    %c1_i32 = arith.constant 1 : i32
    %27 = tpu.dynamic_rotate %11 by %c1_i32 dim 1 : vector<4x256xf32>, i32 -> vector<4x256xf32>
    %c3 = arith.constant 3 : index
    %c0_10 = arith.constant 0 : index
    %c0_11 = arith.constant 0 : index
    %28 = vector.load %arg4[%c3, %c0_10, %c0_11] : memref<9x1x256xf32, #tpu.memory_space<vmem>>, vector<1x1x256xf32>
    %29 = vector.shape_cast %28 : vector<1x1x256xf32> to vector<1x256xf32>
    %30 = vector.broadcast %29 : vector<1x256xf32> to vector<4x256xf32>
    %31 = arith.mulf %27, %30 : vector<4x256xf32>
    %c255_i32 = arith.constant 255 : i32
    %32 = tpu.dynamic_rotate %11 by %c255_i32 dim 1 : vector<4x256xf32>, i32 -> vector<4x256xf32>
    %c5 = arith.constant 5 : index
    %c0_12 = arith.constant 0 : index
    %c0_13 = arith.constant 0 : index
    %33 = vector.load %arg4[%c5, %c0_12, %c0_13] : memref<9x1x256xf32, #tpu.memory_space<vmem>>, vector<1x1x256xf32>
    %34 = vector.shape_cast %33 : vector<1x1x256xf32> to vector<1x256xf32>
    %35 = vector.broadcast %34 : vector<1x256xf32> to vector<4x256xf32>
    %36 = arith.mulf %32, %35 : vector<4x256xf32>
    %c241_i32 = arith.constant 241 : i32
    %37 = tpu.dynamic_rotate %11 by %c241_i32 dim 1 : vector<4x256xf32>, i32 -> vector<4x256xf32>
    %c6 = arith.constant 6 : index
    %c0_14 = arith.constant 0 : index
    %c0_15 = arith.constant 0 : index
    %38 = vector.load %arg4[%c6, %c0_14, %c0_15] : memref<9x1x256xf32, #tpu.memory_space<vmem>>, vector<1x1x256xf32>
    %39 = vector.shape_cast %38 : vector<1x1x256xf32> to vector<1x256xf32>
    %40 = vector.broadcast %39 : vector<1x256xf32> to vector<4x256xf32>
    %41 = arith.mulf %37, %40 : vector<4x256xf32>
    %c240_i32 = arith.constant 240 : i32
    %42 = tpu.dynamic_rotate %11 by %c240_i32 dim 1 : vector<4x256xf32>, i32 -> vector<4x256xf32>
    %c7 = arith.constant 7 : index
    %c0_16 = arith.constant 0 : index
    %c0_17 = arith.constant 0 : index
    %43 = vector.load %arg4[%c7, %c0_16, %c0_17] : memref<9x1x256xf32, #tpu.memory_space<vmem>>, vector<1x1x256xf32>
    %44 = vector.shape_cast %43 : vector<1x1x256xf32> to vector<1x256xf32>
    %45 = vector.broadcast %44 : vector<1x256xf32> to vector<4x256xf32>
    %46 = arith.mulf %42, %45 : vector<4x256xf32>
    %c239_i32 = arith.constant 239 : i32
    %47 = tpu.dynamic_rotate %11 by %c239_i32 dim 1 : vector<4x256xf32>, i32 -> vector<4x256xf32>
    %c8 = arith.constant 8 : index
    %c0_18 = arith.constant 0 : index
    %c0_19 = arith.constant 0 : index
    %48 = vector.load %arg4[%c8, %c0_18, %c0_19] : memref<9x1x256xf32, #tpu.memory_space<vmem>>, vector<1x1x256xf32>
    %49 = vector.shape_cast %48 : vector<1x1x256xf32> to vector<1x256xf32>
    %50 = vector.broadcast %49 : vector<1x256xf32> to vector<4x256xf32>
    %51 = arith.mulf %47, %50 : vector<4x256xf32>
    %52 = tpu.concatenate %16, %21, %26, %31, %11, %36, %41, %46, %51 in 0 : vector<4x256xf32>, vector<4x256xf32>, vector<4x256xf32>, vector<4x256xf32>, vector<4x256xf32>, vector<4x256xf32>, vector<4x256xf32>, vector<4x256xf32>, vector<4x256xf32> -> vector<36x256xf32>
    %53 = arith.truncf %52 : vector<36x256xf32> to vector<36x256xbf16>
    %c0_20 = arith.constant 0 : index
    %c0_21 = arith.constant 0 : index
    %54 = vector.load %arg2[%c0_20, %c0_21] : memref<4x36xbf16, #tpu.memory_space<vmem>>, vector<4x36xbf16>
    %cst_22 = arith.constant dense<0.000000e+00> : vector<4x256xf32>
    %55 = tpu.matmul %54, %53, %cst_22 {dimension_numbers = #tpu.dot_dimension_numbers<[1], [0], [0], [1], [0, 0, 1, 1], [], []>} : vector<4x36xbf16>, vector<36x256xbf16>, vector<4x256xf32> -> vector<4x256xf32>
    %56 = vector.broadcast %4 : vector<4x1xf32> to vector<4x256xf32>
    %57 = arith.mulf %55, %56 : vector<4x256xf32>
    %58 = vector.broadcast %5 : vector<4x1xf32> to vector<4x256xf32>
    %59 = arith.addf %57, %58 : vector<4x256xf32>
    %cst_23 = arith.constant 0.000000e+00 : f32
    %60 = vector.broadcast %cst_23 : f32 to vector<4x256xf32>
    %61 = arith.maximumf %59, %60 : vector<4x256xf32>
    %c17_i32_24 = arith.constant 17 : i32
    %62 = tpu.dynamic_rotate %61 by %c17_i32_24 dim 1 : vector<4x256xf32>, i32 -> vector<4x256xf32>
    %c0_25 = arith.constant 0 : index
    %c0_26 = arith.constant 0 : index
    %c0_27 = arith.constant 0 : index
    %63 = vector.load %arg4[%c0_25, %c0_26, %c0_27] : memref<9x1x256xf32, #tpu.memory_space<vmem>>, vector<1x1x256xf32>
    %64 = vector.shape_cast %63 : vector<1x1x256xf32> to vector<1x256xf32>
    %65 = vector.broadcast %64 : vector<1x256xf32> to vector<4x256xf32>
    %66 = arith.mulf %62, %65 : vector<4x256xf32>
    %c16_i32_28 = arith.constant 16 : i32
    %67 = tpu.dynamic_rotate %61 by %c16_i32_28 dim 1 : vector<4x256xf32>, i32 -> vector<4x256xf32>
    %c1_29 = arith.constant 1 : index
    %c0_30 = arith.constant 0 : index
    %c0_31 = arith.constant 0 : index
    %68 = vector.load %arg4[%c1_29, %c0_30, %c0_31] : memref<9x1x256xf32, #tpu.memory_space<vmem>>, vector<1x1x256xf32>
    %69 = vector.shape_cast %68 : vector<1x1x256xf32> to vector<1x256xf32>
    %70 = vector.broadcast %69 : vector<1x256xf32> to vector<4x256xf32>
    %71 = arith.mulf %67, %70 : vector<4x256xf32>
    %c15_i32_32 = arith.constant 15 : i32
    %72 = tpu.dynamic_rotate %61 by %c15_i32_32 dim 1 : vector<4x256xf32>, i32 -> vector<4x256xf32>
    %c2_33 = arith.constant 2 : index
    %c0_34 = arith.constant 0 : index
    %c0_35 = arith.constant 0 : index
    %73 = vector.load %arg4[%c2_33, %c0_34, %c0_35] : memref<9x1x256xf32, #tpu.memory_space<vmem>>, vector<1x1x256xf32>
    %74 = vector.shape_cast %73 : vector<1x1x256xf32> to vector<1x256xf32>
    %75 = vector.broadcast %74 : vector<1x256xf32> to vector<4x256xf32>
    %76 = arith.mulf %72, %75 : vector<4x256xf32>
    %c1_i32_36 = arith.constant 1 : i32
    %77 = tpu.dynamic_rotate %61 by %c1_i32_36 dim 1 : vector<4x256xf32>, i32 -> vector<4x256xf32>
    %c3_37 = arith.constant 3 : index
    %c0_38 = arith.constant 0 : index
    %c0_39 = arith.constant 0 : index
    %78 = vector.load %arg4[%c3_37, %c0_38, %c0_39] : memref<9x1x256xf32, #tpu.memory_space<vmem>>, vector<1x1x256xf32>
    %79 = vector.shape_cast %78 : vector<1x1x256xf32> to vector<1x256xf32>
    %80 = vector.broadcast %79 : vector<1x256xf32> to vector<4x256xf32>
    %81 = arith.mulf %77, %80 : vector<4x256xf32>
    %c255_i32_40 = arith.constant 255 : i32
    %82 = tpu.dynamic_rotate %61 by %c255_i32_40 dim 1 : vector<4x256xf32>, i32 -> vector<4x256xf32>
    %c5_41 = arith.constant 5 : index
    %c0_42 = arith.constant 0 : index
    %c0_43 = arith.constant 0 : index
    %83 = vector.load %arg4[%c5_41, %c0_42, %c0_43] : memref<9x1x256xf32, #tpu.memory_space<vmem>>, vector<1x1x256xf32>
    %84 = vector.shape_cast %83 : vector<1x1x256xf32> to vector<1x256xf32>
    %85 = vector.broadcast %84 : vector<1x256xf32> to vector<4x256xf32>
    %86 = arith.mulf %82, %85 : vector<4x256xf32>
    %c241_i32_44 = arith.constant 241 : i32
    %87 = tpu.dynamic_rotate %61 by %c241_i32_44 dim 1 : vector<4x256xf32>, i32 -> vector<4x256xf32>
    %c6_45 = arith.constant 6 : index
    %c0_46 = arith.constant 0 : index
    %c0_47 = arith.constant 0 : index
    %88 = vector.load %arg4[%c6_45, %c0_46, %c0_47] : memref<9x1x256xf32, #tpu.memory_space<vmem>>, vector<1x1x256xf32>
    %89 = vector.shape_cast %88 : vector<1x1x256xf32> to vector<1x256xf32>
    %90 = vector.broadcast %89 : vector<1x256xf32> to vector<4x256xf32>
    %91 = arith.mulf %87, %90 : vector<4x256xf32>
    %c240_i32_48 = arith.constant 240 : i32
    %92 = tpu.dynamic_rotate %61 by %c240_i32_48 dim 1 : vector<4x256xf32>, i32 -> vector<4x256xf32>
    %c7_49 = arith.constant 7 : index
    %c0_50 = arith.constant 0 : index
    %c0_51 = arith.constant 0 : index
    %93 = vector.load %arg4[%c7_49, %c0_50, %c0_51] : memref<9x1x256xf32, #tpu.memory_space<vmem>>, vector<1x1x256xf32>
    %94 = vector.shape_cast %93 : vector<1x1x256xf32> to vector<1x256xf32>
    %95 = vector.broadcast %94 : vector<1x256xf32> to vector<4x256xf32>
    %96 = arith.mulf %92, %95 : vector<4x256xf32>
    %c239_i32_52 = arith.constant 239 : i32
    %97 = tpu.dynamic_rotate %61 by %c239_i32_52 dim 1 : vector<4x256xf32>, i32 -> vector<4x256xf32>
    %c8_53 = arith.constant 8 : index
    %c0_54 = arith.constant 0 : index
    %c0_55 = arith.constant 0 : index
    %98 = vector.load %arg4[%c8_53, %c0_54, %c0_55] : memref<9x1x256xf32, #tpu.memory_space<vmem>>, vector<1x1x256xf32>
    %99 = vector.shape_cast %98 : vector<1x1x256xf32> to vector<1x256xf32>
    %100 = vector.broadcast %99 : vector<1x256xf32> to vector<4x256xf32>
    %101 = arith.mulf %97, %100 : vector<4x256xf32>
    %102 = tpu.concatenate %66, %71, %76, %81, %61, %86, %91, %96, %101 in 0 : vector<4x256xf32>, vector<4x256xf32>, vector<4x256xf32>, vector<4x256xf32>, vector<4x256xf32>, vector<4x256xf32>, vector<4x256xf32>, vector<4x256xf32>, vector<4x256xf32> -> vector<36x256xf32>
    %103 = arith.truncf %102 : vector<36x256xf32> to vector<36x256xbf16>
    %c0_56 = arith.constant 0 : index
    %c0_57 = arith.constant 0 : index
    %104 = vector.load %arg3[%c0_56, %c0_57] : memref<4x36xbf16, #tpu.memory_space<vmem>>, vector<4x36xbf16>
    %cst_58 = arith.constant dense<0.000000e+00> : vector<4x256xf32>
    %105 = tpu.matmul %104, %103, %cst_58 {dimension_numbers = #tpu.dot_dimension_numbers<[1], [0], [0], [1], [0, 0, 1, 1], [], []>} : vector<4x36xbf16>, vector<36x256xbf16>, vector<4x256xf32> -> vector<4x256xf32>
    %106 = arith.addf %0, %105 : vector<4x256xf32>
    %c0_59 = arith.constant 0 : index
    %c0_60 = arith.constant 0 : index
    %107 = vector.load %arg6[%c0_59, %c0_60] : memref<4x256xf32, #tpu.memory_space<vmem>>, vector<4x256xf32>
    tpu.vector_store %arg6[%c0_59, %c0_60], %106 {strides = array<i32>} : memref<4x256xf32, #tpu.memory_space<vmem>>, vector<4x256xf32>,
    return
  }
  func.func @transform_0(%arg0: i32) -> (i32, i32) {
    %c0_i32 = arith.constant 0 : i32
    %c0_i32_0 = arith.constant 0 : i32
    return %c0_i32, %arg0 : i32, i32
  }
  func.func @transform_1(%arg0: i32) -> (i32, i32) {
    %c0_i32 = arith.constant 0 : i32
    %c0_i32_0 = arith.constant 0 : i32
    %c0_i32_1 = arith.constant 0 : i32
    return %c0_i32, %c0_i32_0 : i32, i32
  }
  func.func @transform_2(%arg0: i32) -> (i32, i32) {
    %c0_i32 = arith.constant 0 : i32
    %c0_i32_0 = arith.constant 0 : i32
    %c0_i32_1 = arith.constant 0 : i32
    return %c0_i32, %c0_i32_0 : i32, i32
  }
  func.func @transform_3(%arg0: i32) -> (i32, i32, i32) {
    %c0_i32 = arith.constant 0 : i32
    %c0_i32_0 = arith.constant 0 : i32
    %c0_i32_1 = arith.constant 0 : i32
    %c0_i32_2 = arith.constant 0 : i32
    return %c0_i32, %c0_i32_0, %c0_i32_1 : i32, i32, i32
  }
  func.func @transform_4(%arg0: i32) -> (i32, i32) {
    %c0_i32 = arith.constant 0 : i32
    %c0_i32_0 = arith.constant 0 : i32
    %c0_i32_1 = arith.constant 0 : i32
    return %c0_i32, %c0_i32_0 : i32, i32
  }
  func.func @transform_5(%arg0: i32) -> (i32, i32) {
    %c0_i32 = arith.constant 0 : i32
    %c0_i32_0 = arith.constant 0 : i32
    return %c0_i32, %arg0 : i32, i32
  }
}

</mosaic_0001>

<llo_original>
// kernel: tpu_custom_call.1
$region0: #{tpu_custom_call.1}
  #allocation0 [shape = 'u32[]', space=smem, size = 0x4, offset = 0x4, fixed_abs, tag = 'smem constant byte address 0x4 - core index']
  #allocation1 [shape = 'u32[144,128]{1,0:T(1,128)}', space=vmem, size = 0x12000, scoped, tag = 'internal scratch']
  %s0 = inlined_call_operand.hbm [shape: f32[4,512], index: 0, kind: input, shape index: {}]
  %s1 = inlined_call_operand.vmem [shape: bf16[4,36], index: 1, kind: input, shape index: {}]
  %s2 = inlined_call_operand.hbm [shape: bf16[4,36], index: 2, kind: input, shape index: {}]
  %s3 = inlined_call_operand.hbm [shape: f32[9,1,256], index: 3, kind: input, shape index: {}]
  %s4 = inlined_call_operand.vmem [shape: f32[4,4], index: 4, kind: input, shape index: {}]
  %s5 = inlined_call_operand.hbm [shape: f32[4,512], index: 5, kind: output, shape index: {}]
  %s6 = sld [smem:[#allocation0]]
  $region65: #{tpu_custom_call.1} parent=0
    _
  %s8 = ssub.s32 1, %s6
  %s9 = scalar_select 0, %s8, %s6
  $region1: #{tpu_custom_call.1} parent=0
    #allocation2 [shape = 'u8[8192]{0}', space=vmem, size = 0x2000, scoped, tag = 'input window, operand 0']
    #allocation3 [shape = 's32[2]{0}', space=sflag, size = 0x8, scoped, tag = 'scoped memory for tpu_custom_call.1']
    #allocation4 [shape = 's32[2]{0}', space=sflag, size = 0x8, scoped, tag = 'scoped memory for tpu_custom_call.1']
    #allocation5 [shape = 'u8[1024]{0}', space=vmem, size = 0x400, scoped, tag = 'input window, operand 2, single buffered']
    #allocation6 [shape = 's32[1]{0}', space=sflag, size = 0x4, scoped, tag = 'scoped memory for tpu_custom_call.1']
    #allocation7 [shape = 'u8[9216]{0}', space=vmem, size = 0x2400, scoped, tag = 'input window, operand 3, single buffered']
    #allocation8 [shape = 'u8[8192]{0}', space=vmem, size = 0x2000, scoped, tag = 'output window, operand 0']
    %10 = vsyncpa [#allocation3], 0
    %s11 = scalar_lea.sflag [#allocation3], 1
    %12 = vsyncpa %s11, 0
    %13 = vsyncpa [#allocation6], 0
    %14 = vsyncpa [#allocation4], 0
    %s15 = scalar_lea.sflag [#allocation4], 1
    %16 = vsyncpa %s15, 0
    loop: start=0, step=1, limit=4
    $region2: #{tpu_custom_call.1} parent=1 // loop_pre_header
      _
    $region3: #{tpu_custom_call.1} parent=1 // loop_header
      %s18 = sphi 0, %s22
      %p19 = scmp.ge.s32.totalorder %s18, 4
      %s28 = sphi 0, %s30
      %s31 = sphi 0, %s28
      %s32 = sphi 0, %s31
      %s48 = sphi 0, %s32
      %s52 = sphi 0, %s52
      %s54 = sphi 0, %s52
      %s55 = sphi 0, %s54
      %s69 = sphi 0, %s55
      %s73 = sphi 0, %s73
      %s75 = sphi 0, %s73
      %s76 = sphi 0, %s75
      %s90 = sphi 0, %s76
      %s94 = sphi 0, %s94
      %s96 = sphi 0, %s94
      %s97 = sphi 0, %s96
      %s111 = sphi 0, %s97
      %s115 = sphi 0, %s115
      %s117 = sphi 0, %s115
      %s118 = sphi 0, %s117
      %s132 = sphi 0, %s118
      %s138 = sphi 0, %s140
      %s141 = sphi 0, %s138
      %s142 = sphi 0, %s141
      %s158 = sphi 0, %s142
    $region4: #{tpu_custom_call.1} parent=1 // loop_header_branch
      %21 = sbr.rel (%p19) target = $region8
    $region5: #{tpu_custom_call.1} parent=1 // loop_body
      %s23 = ssub.s32 %s18, 1
      %s24 = ssub.s32 %s18, 2
      %s25 = sadd.s32 %s18, 1
      %s26 = ssub.s32 %s18, %s25
      %p27 = scmp.eq.s32.totalorder %s26, 0
      %s29 = sadd.s32 %s28, 1
      %s30 = scalar_select %p27, %s28, %s29
      %p33 = pneg %p27
      %p34 = scmp.eq.s32.totalorder %s18, 1
      %p35 = por %p33, %p34
      %p36 = scmp.ne.s32.totalorder %s28, %s31
      %p37 = scmp.eq.s32.totalorder %s18, 0
      %p38 = por %p36, %p37
      %p39 = scmp.ne.s32.totalorder %s28, %s31
      %p40 = scmp.eq.s32.totalorder %s23, 1
      %p41 = por %p39, %p40
      %p42 = scmp.ne.s32.totalorder %s31, %s32
      %p43 = scmp.eq.s32.totalorder %s23, 0
      %p44 = por %p42, %p43
      %p45 = scmp.ne.s32.totalorder %s31, %s32
      %p46 = scmp.eq.s32.totalorder %s24, 1
      %p47 = por %p45, %p46
      %p49 = scmp.ne.s32.totalorder %s32, %s48
      %p50 = scmp.eq.s32.totalorder %s24, 0
      %p51 = por %p49, %p50
      %s53 = sadd.s32 %s52, 1
      %p56 = scmp.eq.s32.totalorder %s18, 1
      %p57 = scmp.ne.s32.totalorder %s52, %s54
      %p58 = scmp.eq.s32.totalorder %s18, 0
      %p59 = por %p57, %p58
      %p60 = scmp.ne.s32.totalorder %s52, %s54
      %p61 = scmp.eq.s32.totalorder %s23, 1
      %p62 = por %p60, %p61
      %p63 = scmp.ne.s32.totalorder %s54, %s55
      %p64 = scmp.eq.s32.totalorder %s23, 0
      %p65 = por %p63, %p64
      %p66 = scmp.ne.s32.totalorder %s54, %s55
      %p67 = scmp.eq.s32.totalorder %s24, 1
      %p68 = por %p66, %p67
      %p70 = scmp.ne.s32.totalorder %s55, %s69
      %p71 = scmp.eq.s32.totalorder %s24, 0
      %p72 = por %p70, %p71
      %s74 = sadd.s32 %s73, 1
      %p77 = scmp.eq.s32.totalorder %s18, 1
      %p78 = scmp.ne.s32.totalorder %s73, %s75
      %p79 = scmp.eq.s32.totalorder %s18, 0
      %p80 = por %p78, %p79
      %p81 = scmp.ne.s32.totalorder %s73, %s75
      %p82 = scmp.eq.s32.totalorder %s23, 1
      %p83 = por %p81, %p82
      %p84 = scmp.ne.s32.totalorder %s75, %s76
      %p85 = scmp.eq.s32.totalorder %s23, 0
      %p86 = por %p84, %p85
      %p87 = scmp.ne.s32.totalorder %s75, %s76
      %p88 = scmp.eq.s32.totalorder %s24, 1
      %p89 = por %p87, %p88
      %p91 = scmp.ne.s32.totalorder %s76, %s90
      %p92 = scmp.eq.s32.totalorder %s24, 0
      %p93 = por %p91, %p92
      %s95 = sadd.s32 %s94, 1
      %p98 = scmp.eq.s32.totalorder %s18, 1
      %p99 = scmp.ne.s32.totalorder %s94, %s96
      %p100 = scmp.eq.s32.totalorder %s18, 0
      %p101 = por %p99, %p100
      %p102 = scmp.ne.s32.totalorder %s94, %s96
      %p103 = scmp.eq.s32.totalorder %s23, 1
      %p104 = por %p102, %p103
      %p105 = scmp.ne.s32.totalorder %s96, %s97
      %p106 = scmp.eq.s32.totalorder %s23, 0
      %p107 = por %p105, %p106
      %p108 = scmp.ne.s32.totalorder %s96, %s97
      %p109 = scmp.eq.s32.totalorder %s24, 1
      %p110 = por %p108, %p109
      %p112 = scmp.ne.s32.totalorder %s97, %s111
      %p113 = scmp.eq.s32.totalorder %s24, 0
      %p114 = por %p112, %p113
      %s116 = sadd.s32 %s115, 1
      %p119 = scmp.eq.s32.totalorder %s18, 1
      %p120 = scmp.ne.s32.totalorder %s115, %s117
      %p121 = scmp.eq.s32.totalorder %s18, 0
      %p122 = por %p120, %p121
      %p123 = scmp.ne.s32.totalorder %s115, %s117
      %p124 = scmp.eq.s32.totalorder %s23, 1
      %p125 = por %p123, %p124
      %p126 = scmp.ne.s32.totalorder %s117, %s118
      %p127 = scmp.eq.s32.totalorder %s23, 0
      %p128 = por %p126, %p127
      %p129 = scmp.ne.s32.totalorder %s117, %s118
      %p130 = scmp.eq.s32.totalorder %s24, 1
      %p131 = por %p129, %p130
      %p133 = scmp.ne.s32.totalorder %s118, %s132
      %p134 = scmp.eq.s32.totalorder %s24, 0
      %p135 = por %p133, %p134
      %s136 = ssub.s32 %s18, %s25
      %p137 = scmp.eq.s32.totalorder %s136, 0
      %s139 = sadd.s32 %s138, 1
      %s140 = scalar_select %p137, %s138, %s139
      %p143 = pneg %p137
      %p144 = scmp.eq.s32.totalorder %s18, 1
      %p145 = por %p143, %p144
      %p146 = scmp.ne.s32.totalorder %s138, %s141
      %p147 = scmp.eq.s32.totalorder %s18, 0
      %p148 = por %p146, %p147
      %p149 = scmp.ne.s32.totalorder %s138, %s141
      %p150 = scmp.eq.s32.totalorder %s23, 1
      %p151 = por %p149, %p150
      %p152 = scmp.ne.s32.totalorder %s141, %s142
      %p153 = scmp.eq.s32.totalorder %s23, 0
      %p154 = por %p152, %p153
      %p155 = scmp.ne.s32.totalorder %s141, %s142
      %p156 = scmp.eq.s32.totalorder %s24, 1
      %p157 = por %p155, %p156
      %p159 = scmp.ne.s32.totalorder %s142, %s158
      %p160 = scmp.eq.s32.totalorder %s24, 0
      %p161 = por %p159, %p160
      %p162 = scmp.le.s32.totalorder 1, %s18
      %p163 = scmp.lt.s32.totalorder %s18, 3
      %p164 = pnand %p162, %p163
      %p165 = pneg %p164
      // Predicated region
      $region9: #{tpu_custom_call.1} parent=5 // pred_check
        _
      $region10: #{tpu_custom_call.1} parent=5 // pred_check_branch
        %167 = sbr.rel (%p164) target = $region12
      $region11: #{tpu_custom_call.1} parent=5 // pred_region
        %s168 = ssub.s32 %s18, 1
        // Predicated region
        $region13: #{tpu_custom_call.1} parent=11 // pred_check
          %p169 = pneg %p65
        $region14: #{tpu_custom_call.1} parent=11 // pred_check_branch
          %171 = sbr.rel (%p169) target = $region16
        $region15: #{tpu_custom_call.1} parent=11 // pred_region
          _
        $region16: #{tpu_custom_call.1} parent=11 // pred_fallthru
          _
        // Predicated region
        $region17: #{tpu_custom_call.1} parent=11 // pred_check
          %p172 = pneg %p86
        $region18: #{tpu_custom_call.1} parent=11 // pred_check_branch
          %174 = sbr.rel (%p172) target = $region20
        $region19: #{tpu_custom_call.1} parent=11 // pred_region
          %s176 = ssub.s32 32, 32
          %177 = vsyncadd [#allocation6], %s176
          %s179 = sshll.u32 [#allocation5], 4
          %s180 = int_to_ptr.vmem [resolvable:$true] %s179
          %182 = dma.hbm_to_vmem [thread:$0]  %s2, 32, %s180, [#allocation6]
        $region20: #{tpu_custom_call.1} parent=11 // pred_fallthru
          _
        // Predicated region
        $region21: #{tpu_custom_call.1} parent=11 // pred_check
          %p183 = pneg %p107
        $region22: #{tpu_custom_call.1} parent=11 // pred_check_branch
          %185 = sbr.rel (%p183) target = $region24
        $region23: #{tpu_custom_call.1} parent=11 // pred_region
          %s187 = ssub.s32 288, 288
          %188 = vsyncadd [#allocation6], %s187
          %s189 = sshll.u32 [#allocation7], 4
          %s190 = int_to_ptr.vmem [resolvable:$true] %s189
          %195 = dma.hbm_to_vmem [thread:$0]  %s3, 288, %s190, [#allocation6], 32, 32, 2
        $region24: #{tpu_custom_call.1} parent=11 // pred_fallthru
          _
        // Predicated region
        $region25: #{tpu_custom_call.1} parent=11 // pred_check
          %p196 = pneg %p128
        $region26: #{tpu_custom_call.1} parent=11 // pred_check_branch
          %198 = sbr.rel (%p196) target = $region28
        $region27: #{tpu_custom_call.1} parent=11 // pred_region
          _
        $region28: #{tpu_custom_call.1} parent=11 // pred_fallthru
          _
      $region12: #{tpu_custom_call.1} parent=5 // pred_fallthru
        _
      %p199 = scmp.lt.s32.totalorder %s18, 2
      // Predicated region
      $region29: #{tpu_custom_call.1} parent=5 // pred_check
        %p200 = pneg %p199
      $region30: #{tpu_custom_call.1} parent=5 // pred_check_branch
        %202 = sbr.rel (%p200) target = $region32
      $region31: #{tpu_custom_call.1} parent=5 // pred_region
        // Predicated region
        $region33: #{tpu_custom_call.1} parent=31 // pred_check
          %p203 = pneg %p38
        $region34: #{tpu_custom_call.1} parent=31 // pred_check_branch
          %205 = sbr.rel (%p203) target = $region36
        $region35: #{tpu_custom_call.1} parent=31 // pred_region
          %s206 = sand.u32 %s28, 1
          %s207 = scalar_lea.sflag [#allocation3], %s206
          %s208 = sand.u32 %s28, 1
          %s209 = smul.addr %s208, 8
          %s210 = scalar_lea.vmem [#allocation2], %s209
          %s211 = smul.u32 2, %s18
          %s213 = ssub.s32 128, 128
          %214 = vsyncadd %s207, %s213
          %s215 = smul.addr %s211, 64
          %s216 = scalar_lea.hbm %s0, %s215
          %s218 = sshll.u32 %s210, 4
          %s219 = int_to_ptr.vmem [resolvable:$true] %s218
          %221 = dma.hbm_to_vmem [thread:$0]  %s216, 128, %s219, %s207
        $region36: #{tpu_custom_call.1} parent=31 // pred_fallthru
          _
      $region32: #{tpu_custom_call.1} parent=5 // pred_fallthru
        _
      %p222 = scmp.le.s32.totalorder 1, %s18
      %p223 = scmp.lt.s32.totalorder %s18, 3
      %p224 = pnand %p222, %p223
      %p225 = pneg %p224
      // Predicated region
      $region37: #{tpu_custom_call.1} parent=5 // pred_check
        _
      $region38: #{tpu_custom_call.1} parent=5 // pred_check_branch
        %227 = sbr.rel (%p224) target = $region40
      $region39: #{tpu_custom_call.1} parent=5 // pred_region
        %s228 = ssub.s32 %s18, 1
        %s229 = sand.u32 %s31, 1
        %s230 = scalar_lea.sflag [#allocation3], %s229
        %s231 = sand.u32 %s31, 1
        %s232 = smul.addr %s231, 8
        %s233 = scalar_lea.vmem [#allocation2], %s232
        // Predicated region
        $region41: #{tpu_custom_call.1} parent=39 // pred_check
          %p234 = pneg %p44
        $region42: #{tpu_custom_call.1} parent=39 // pred_check_branch
          %236 = sbr.rel (%p234) target = $region44
        $region43: #{tpu_custom_call.1} parent=39 // pred_region
          %237 = dma.done %s230, 128
        $region44: #{tpu_custom_call.1} parent=39 // pred_fallthru
          _
        // Predicated region
        $region45: #{tpu_custom_call.1} parent=39 // pred_check
          %p238 = pneg %p86
        $region46: #{tpu_custom_call.1} parent=39 // pred_check_branch
          %240 = sbr.rel (%p238) target = $region48
        $region47: #{tpu_custom_call.1} parent=39 // pred_region
          %241 = dma.done [#allocation6], 32
        $region48: #{tpu_custom_call.1} parent=39 // pred_fallthru
          _
        // Predicated region
        $region49: #{tpu_custom_call.1} parent=39 // pred_check
          %p242 = pneg %p107
        $region50: #{tpu_custom_call.1} parent=39 // pred_check_branch
          %244 = sbr.rel (%p242) target = $region52
        $region51: #{tpu_custom_call.1} parent=39 // pred_region
          %245 = dma.done [#allocation6], 288
        $region52: #{tpu_custom_call.1} parent=39 // pred_fallthru
          _
        %s246 = sand.u32 %s31, 1
        %s247 = scalar_lea.sflag [#allocation3], %s246
        %s248 = sand.u32 %s31, 1
        %s249 = smul.addr %s248, 8
        %s250 = scalar_lea.vmem [#allocation2], %s249
        %p251 = pneg %p44
        %p252 = pneg %p41
        %p253 = pneg %p65
        %p254 = pneg %p62
        %p255 = pneg %p86
        %p256 = pneg %p83
        %p257 = pneg %p107
        %p258 = pneg %p104
        %p259 = pneg %p128
        %p260 = pneg %p125
        %p261 = pneg %p154
        %p262 = pneg %p151
        %s263 = sand.u32 %s141, 1
        %s264 = scalar_lea.sflag [#allocation4], %s263
        %s265 = sand.u32 %s141, 1
        %s266 = smul.addr %s265, 8
        %s267 = scalar_lea.vmem [#allocation8], %s266
        %s268 = smul.u32 2, %s23
        %s269 = smul.u32 2, %s23
        %v271 = vld [vmem:[%s233] sm:$0xff]
        %v272 = vld [vmem:[%s4] sm:$0xf]
        %274 = vset.pattern.permute.xlu0 0
        %275 = vperm.xlu0 %274, %v272
        %v276 = vpop.permute.xlu0 %275
        %v278 = vunpack.c.l.s4 839922192
        %v279 = vunpack.c.0.s8 %v278
        %v280 = vlaneseq
        %v281 = vshrl.u32 %v280, 7
        %v282 = vsub.s32 %v279, %v281
        %v283 = vrot.slane %v276, %v282
        %v285 = vmul.f32 %v271, %v283
        %286 = vset.pattern.permute.xlu0 1
        %287 = vperm.xlu0 %286, %v272
        %v288 = vpop.permute.xlu0 %287
        %v290 = vunpack.c.l.s4 839922192
        %v291 = vunpack.c.0.s8 %v290
        %v292 = vlaneseq
        %v293 = vshrl.u32 %v292, 7
        %v294 = vsub.s32 %v291, %v293
        %v295 = vrot.slane %v288, %v294
        %v297 = vadd.f32 %v285, %v295
        %v298 = vmax.f32 %v297, 0.0
        %v300 = vcombine.high %v298, %v298
        %302 = vrot.lane.b32.xlu0 %v298, 17
        %v303 = vpop.permute.xlu0 %302
        %304 = vrot.lane.b32.xlu0 %v300, 17
        %v305 = vpop.permute.xlu0 %304
        %v306 = vlaneseq
        %v307 = vand.u32 %v306, 127
        %vm308 = vcmp.lt.s32.totalorder %v307, 17
        %v309 = vsel %vm308, %v303, %v305
        %v310 = vsel %vm308, %v305, %v303
        %v311 = vld [vmem:[#allocation7] sm:$0x3]
        %v313 = vlaneseq
        %v314 = vshrl.u32 %v313, 7
        %v315 = vsub.s32 0, %v314
        %v316 = vrot.slane %v311, %v315
        %v317 = vlaneseq
        %v318 = vshrl.u32 %v317, 7
        %v319 = vsub.s32 1, %v318
        %v320 = vrot.slane %v311, %v319
        %v323 = vmul.f32 %v310, %v316
        %v324 = vmul.f32 %v309, %v320
        %325 = vrot.lane.b32.xlu0 %v298, 16
        %v326 = vpop.permute.xlu0 %325
        %327 = vrot.lane.b32.xlu0 %v300, 16
        %v328 = vpop.permute.xlu0 %327
        %vm329 = vcmp.lt.s32.totalorder %v307, 16
        %v330 = vsel %vm329, %v326, %v328
        %v331 = vsel %vm329, %v328, %v326
        %s332 = scalar_lea.vmem [#allocation7], 2
        %v333 = vld [vmem:[%s332] sm:$0x3]
        %v335 = vlaneseq
        %v336 = vshrl.u32 %v335, 7
        %v337 = vsub.s32 0, %v336
        %v338 = vrot.slane %v333, %v337
        %v339 = vlaneseq
        %v340 = vshrl.u32 %v339, 7
        %v341 = vsub.s32 1, %v340
        %v342 = vrot.slane %v333, %v341
        %v345 = vmul.f32 %v331, %v338
        %v346 = vmul.f32 %v330, %v342
        %347 = vrot.lane.b32.xlu0 %v298, 15
        %v348 = vpop.permute.xlu0 %347
        %349 = vrot.lane.b32.xlu0 %v300, 15
        %v350 = vpop.permute.xlu0 %349
        %vm351 = vcmp.lt.s32.totalorder %v307, 15
        %v352 = vsel %vm351, %v348, %v350
        %v353 = vsel %vm351, %v350, %v348
        %s354 = scalar_lea.vmem [#allocation7], 4
        %v355 = vld [vmem:[%s354] sm:$0x3]
        %v357 = vlaneseq
        %v358 = vshrl.u32 %v357, 7
        %v359 = vsub.s32 0, %v358
        %v360 = vrot.slane %v355, %v359
        %v361 = vlaneseq
        %v362 = vshrl.u32 %v361, 7
        %v363 = vsub.s32 1, %v362
        %v364 = vrot.slane %v355, %v363
        %v367 = vmul.f32 %v353, %v360
        %v368 = vmul.f32 %v352, %v364
        %369 = vrot.lane.b32.xlu0 %v298, 1
        %v370 = vpop.permute.xlu0 %369
        %371 = vrot.lane.b32.xlu0 %v300, 1
        %v372 = vpop.permute.xlu0 %371
        %vm373 = vcmp.lt.s32.totalorder %v307, 1
        %v374 = vsel %vm373, %v370, %v372
        %v375 = vsel %vm373, %v372, %v370
        %s376 = scalar_lea.vmem [#allocation7], 6
        %v377 = vld [vmem:[%s376] sm:$0x3]
        %v379 = vlaneseq
        %v380 = vshrl.u32 %v379, 7
        %v381 = vsub.s32 0, %v380
        %v382 = vrot.slane %v377, %v381
        %v383 = vlaneseq
        %v384 = vshrl.u32 %v383, 7
        %v385 = vsub.s32 1, %v384
        %v386 = vrot.slane %v377, %v385
        %v389 = vmul.f32 %v375, %v382
        %v390 = vmul.f32 %v374, %v386
        %391 = vrot.lane.b32.xlu0 %v298, 127
        %v392 = vpop.permute.xlu0 %391
        %393 = vrot.lane.b32.xlu0 %v300, 127
        %v394 = vpop.permute.xlu0 %393
        %vm395 = vcmp.lt.s32.totalorder %v307, 127
        %v396 = vsel %vm395, %v392, %v394
        %v397 = vsel %vm395, %v394, %v392
        %s398 = scalar_lea.vmem [#allocation7], 10
        %v399 = vld [vmem:[%s398] sm:$0x3]
        %v401 = vlaneseq
        %v402 = vshrl.u32 %v401, 7
        %v403 = vsub.s32 0, %v402
        %v404 = vrot.slane %v399, %v403
        %v405 = vlaneseq
        %v406 = vshrl.u32 %v405, 7
        %v407 = vsub.s32 1, %v406
        %v408 = vrot.slane %v399, %v407
        %v411 = vmul.f32 %v396, %v404
        %v412 = vmul.f32 %v397, %v408
        %413 = vrot.lane.b32.xlu0 %v298, 113
        %v414 = vpop.permute.xlu0 %413
        %415 = vrot.lane.b32.xlu0 %v300, 113
        %v416 = vpop.permute.xlu0 %415
        %vm417 = vcmp.lt.s32.totalorder %v307, 113
        %v418 = vsel %vm417, %v414, %v416
        %v419 = vsel %vm417, %v416, %v414
        %s420 = scalar_lea.vmem [#allocation7], 12
        %v421 = vld [vmem:[%s420] sm:$0x3]
        %v423 = vlaneseq
        %v424 = vshrl.u32 %v423, 7
        %v425 = vsub.s32 0, %v424
        %v426 = vrot.slane %v421, %v425
        %v427 = vlaneseq
        %v428 = vshrl.u32 %v427, 7
        %v429 = vsub.s32 1, %v428
        %v430 = vrot.slane %v421, %v429
        %v433 = vmul.f32 %v418, %v426
        %v434 = vmul.f32 %v419, %v430
        %435 = vrot.lane.b32.xlu0 %v298, 112
        %v436 = vpop.permute.xlu0 %435
        %437 = vrot.lane.b32.xlu0 %v300, 112
        %v438 = vpop.permute.xlu0 %437
        %vm439 = vcmp.lt.s32.totalorder %v307, 112
        %v440 = vsel %vm439, %v436, %v438
        %v441 = vsel %vm439, %v438, %v436
        %s442 = scalar_lea.vmem [#allocation7], 14
        %v443 = vld [vmem:[%s442] sm:$0x3]
        %v445 = vlaneseq
        %v446 = vshrl.u32 %v445, 7
        %v447 = vsub.s32 0, %v446
        %v448 = vrot.slane %v443, %v447
        %v449 = vlaneseq
        %v450 = vshrl.u32 %v449, 7
        %v451 = vsub.s32 1, %v450
        %v452 = vrot.slane %v443, %v451
        %v455 = vmul.f32 %v440, %v448
        %v456 = vmul.f32 %v441, %v452
        %457 = vrot.lane.b32.xlu0 %v298, 111
        %v458 = vpop.permute.xlu0 %457
        %459 = vrot.lane.b32.xlu0 %v300, 111
        %v460 = vpop.permute.xlu0 %459
        %vm461 = vcmp.lt.s32.totalorder %v307, 111
        %v462 = vsel %vm461, %v458, %v460
        %v463 = vsel %vm461, %v460, %v458
        %s464 = scalar_lea.vmem [#allocation7], 16
        %v465 = vld [vmem:[%s464] sm:$0x3]
        %v467 = vlaneseq
        %v468 = vshrl.u32 %v467, 7
        %v469 = vsub.s32 0, %v468
        %v470 = vrot.slane %v465, %v469
        %v471 = vlaneseq
        %v472 = vshrl.u32 %v471, 7
        %v473 = vsub.s32 1, %v472
        %v474 = vrot.slane %v465, %v473
        %v477 = vmul.f32 %v462, %v470
        %v478 = vmul.f32 %v463, %v474
        %v481 = vrot.slane %v345, 4
        %v482 = vrot.slane %v346, 4
        %v487 = vrot.slane %v389, 4
        %v488 = vrot.slane %v390, 4
        %v493 = vrot.slane %v411, 4
        %v494 = vrot.slane %v412, 4
        %v499 = vrot.slane %v455, 4
        %v500 = vrot.slane %v456, 4
        %vm503 = vcmask 1043456
        %v504 = vsel %vm503, %v323, %v481
        %v505 = vsel %vm503, %v324, %v482
        %v506 = vsel %vm503, %v367, %v487
        %v507 = vsel %vm503, %v368, %v488
        %v508 = vsel %vm503, %v298, %v493
        %v509 = vsel %vm503, %v300, %v494
        %v510 = vsel %vm503, %v433, %v499
        %v511 = vsel %vm503, %v434, %v500
        %v512 = vpack.c.bf16 %v506, %v504
        %v513 = vpack.c.bf16 %v507, %v505
        %v514 = vpack.c.bf16 %v510, %v508
        %v515 = vpack.c.bf16 %v511, %v509
        %v516 = vpack.c.bf16 %v477, %v477
        %v517 = vpack.c.bf16 %v478, %v478
        %v518 = vld [vmem:[%s1] sm:$0x3]
        %vm519 = vcmask 293888
        %v521 = vsel %vm519, %v518, 0
        %vm523 = vcmask 1041408
        %v525 = vsel %vm523, %v516, 0
        %v528 = vsel %vm523, %v517, 0
        %530 = vmatprep.subr.bf16.mxu0 %v513
        %531 = vmatpush1.bf16.msra.mxu0 %v512
        %532 = vmatprep.subr.bf16.mxu0 %v515
        %533 = vmatpush1.bf16.msra.mxu0 %v514
        %534 = vmatprep.subr.bf16.mxu0 %v528
        %535 = vmatpush1.bf16.msra.mxu0 %v525
        %536 = vmatprep.subr.bf16.mxu0 0
        %537 = vmatpush1.bf16.msra.mxu0 0
        %538 = vmatprep.subr.bf16.mxu0 0
        %539 = vmatpush1.bf16.msra.mxu0 0
        %540 = vmatprep.subr.bf16.mxu0 0
        %541 = vmatpush1.bf16.msra.mxu0 0
        %542 = vmatprep.subr.bf16.mxu0 0
        %543 = vmatpush1.bf16.msra.mxu0 0
        %544 = vmatprep.subr.bf16.mxu0 0
        %545 = vmatpush1.bf16.msra.mxu0 0
        %546 = vmatprep.subr.bf16.mxu0 0
        %547 = vmatpush1.bf16.msra.mxu0 0
        %548 = vmatprep.subr.bf16.mxu0 0
        %549 = vmatpush1.bf16.msra.mxu0 0
        %550 = vmatprep.subr.bf16.mxu0 0
        %551 = vmatpush1.bf16.msra.mxu0 0
        %552 = vmatprep.subr.bf16.mxu0 0
        %553 = vmatpush1.bf16.msra.mxu0 0
        %554 = vmatprep.subr.bf16.mxu0 0
        %555 = vmatpush1.bf16.msra.mxu0 0
        %556 = vmatprep.subr.bf16.mxu0 0
        %557 = vmatpush1.bf16.msra.mxu0 0
        %558 = vmatprep.subr.bf16.mxu0 0
        %559 = vmatpush1.bf16.msra.mxu0 0
        %560 = vmatprep.subr.bf16.mxu0 0
        %561 = vmatpush1.bf16.msra.mxu0 0
        %562 = vmatprep.mubr.bf16.mxu0 0
        %563 = vmatmul.mubr.bf16.gmra.mrb[0].mxu0 %v521
        %v564 = vpop.f32.mrb[0].mxu0
        %v565 = vadd.f32 0.0, %v564
        %v566 = vpop.f32.mrb[0].mxu0
        %v567 = vadd.f32 0.0, %v566
        %v568 = vpop.f32.mrb[0].mxu0
        %v569 = vpop.f32.mrb[0].mxu0
        %570 = vdwg.mxu0
        %571 = vset.pattern.permute.xlu0 2
        %572 = vperm.xlu0 %571, %v272
        %v573 = vpop.permute.xlu0 %572
        %v575 = vmul.f32 %v565, %v573
        %v576 = vmul.f32 %v567, %v573
        %577 = vset.pattern.permute.xlu0 3
        %578 = vperm.xlu0 %577, %v272
        %v579 = vpop.permute.xlu0 %578
        %v581 = vadd.f32 %v575, %v579
        %v582 = vadd.f32 %v576, %v579
        %v583 = vmax.f32 %v581, 0.0
        %v584 = vmax.f32 %v582, 0.0
        %585 = vrot.lane.b32.xlu0 %v583, 17
        %v586 = vpop.permute.xlu0 %585
        %587 = vrot.lane.b32.xlu0 %v584, 17
        %v588 = vpop.permute.xlu0 %587
        %v589 = vsel %vm308, %v586, %v588
        %v590 = vsel %vm308, %v588, %v586
        %v591 = vmul.f32 %v590, %v316
        %v592 = vmul.f32 %v589, %v320
        %593 = vrot.lane.b32.xlu0 %v583, 16
        %v594 = vpop.permute.xlu0 %593
        %595 = vrot.lane.b32.xlu0 %v584, 16
        %v596 = vpop.permute.xlu0 %595
        %v597 = vsel %vm329, %v594, %v596
        %v598 = vsel %vm329, %v596, %v594
        %v599 = vmul.f32 %v598, %v338
        %v600 = vmul.f32 %v597, %v342
        %601 = vrot.lane.b32.xlu0 %v583, 15
        %v602 = vpop.permute.xlu0 %601
        %603 = vrot.lane.b32.xlu0 %v584, 15
        %v604 = vpop.permute.xlu0 %603
        %v605 = vsel %vm351, %v602, %v604
        %v606 = vsel %vm351, %v604, %v602
        %v607 = vmul.f32 %v606, %v360
        %v608 = vmul.f32 %v605, %v364
        %609 = vrot.lane.b32.xlu0 %v583, 1
        %v610 = vpop.permute.xlu0 %609
        %611 = vrot.lane.b32.xlu0 %v584, 1
        %v612 = vpop.permute.xlu0 %611
        %v613 = vsel %vm373, %v610, %v612
        %v614 = vsel %vm373, %v612, %v610
        %v615 = vmul.f32 %v614, %v382
        %v616 = vmul.f32 %v613, %v386
        %617 = vrot.lane.b32.xlu0 %v583, 127
        %v618 = vpop.permute.xlu0 %617
        %619 = vrot.lane.b32.xlu0 %v584, 127
        %v620 = vpop.permute.xlu0 %619
        %v621 = vsel %vm395, %v618, %v620
        %v622 = vsel %vm395, %v620, %v618
        %v623 = vmul.f32 %v621, %v404
        %v624 = vmul.f32 %v622, %v408
        %625 = vrot.lane.b32.xlu0 %v583, 113
        %v626 = vpop.permute.xlu0 %625
        %627 = vrot.lane.b32.xlu0 %v584, 113
        %v628 = vpop.permute.xlu0 %627
        %v629 = vsel %vm417, %v626, %v628
        %v630 = vsel %vm417, %v628, %v626
        %v631 = vmul.f32 %v629, %v426
        %v632 = vmul.f32 %v630, %v430
        %633 = vrot.lane.b32.xlu0 %v583, 112
        %v634 = vpop.permute.xlu0 %633
        %635 = vrot.lane.b32.xlu0 %v584, 112
        %v636 = vpop.permute.xlu0 %635
        %v637 = vsel %vm439, %v634, %v636
        %v638 = vsel %vm439, %v636, %v634
        %v639 = vmul.f32 %v637, %v448
        %v640 = vmul.f32 %v638, %v452
        %641 = vrot.lane.b32.xlu0 %v583, 111
        %v642 = vpop.permute.xlu0 %641
        %643 = vrot.lane.b32.xlu0 %v584, 111
        %v644 = vpop.permute.xlu0 %643
        %v645 = vsel %vm461, %v642, %v644
        %v646 = vsel %vm461, %v644, %v642
        %v647 = vmul.f32 %v645, %v470
        %v648 = vmul.f32 %v646, %v474
        %v651 = vrot.slane %v599, 4
        %v652 = vrot.slane %v600, 4
        %v657 = vrot.slane %v615, 4
        %v658 = vrot.slane %v616, 4
        %v663 = vrot.slane %v623, 4
        %v664 = vrot.slane %v624, 4
        %v669 = vrot.slane %v639, 4
        %v670 = vrot.slane %v640, 4
        %v673 = vsel %vm503, %v591, %v651
        %v674 = vsel %vm503, %v592, %v652
        %v675 = vsel %vm503, %v607, %v657
        %v676 = vsel %vm503, %v608, %v658
        %v677 = vsel %vm503, %v583, %v663
        %v678 = vsel %vm503, %v584, %v664
        %v679 = vsel %vm503, %v631, %v669
        %v680 = vsel %vm503, %v632, %v670
        %v681 = vpack.c.bf16 %v675, %v673
        %v682 = vpack.c.bf16 %v676, %v674
        %v683 = vpack.c.bf16 %v679, %v677
        %v684 = vpack.c.bf16 %v680, %v678
        %v685 = vpack.c.bf16 %v647, %v647
        %v686 = vpack.c.bf16 %v648, %v648
        %v687 = vld [vmem:[#allocation5] sm:$0x3]
        %v689 = vsel %vm519, %v687, 0
        %v692 = vsel %vm523, %v685, 0
        %v695 = vsel %vm523, %v686, 0
        %697 = vmatprep.subr.bf16.mxu0 %v682
        %698 = vmatpush1.bf16.msra.mxu0 %v681
        %699 = vmatprep.subr.bf16.mxu0 %v684
        %700 = vmatpush1.bf16.msra.mxu0 %v683
        %701 = vmatprep.subr.bf16.mxu0 %v695
        %702 = vmatpush1.bf16.msra.mxu0 %v692
        %703 = vmatprep.subr.bf16.mxu0 0
        %704 = vmatpush1.bf16.msra.mxu0 0
        %705 = vmatprep.subr.bf16.mxu0 0
        %706 = vmatpush1.bf16.msra.mxu0 0
        %707 = vmatprep.subr.bf16.mxu0 0
        %708 = vmatpush1.bf16.msra.mxu0 0
        %709 = vmatprep.subr.bf16.mxu0 0
        %710 = vmatpush1.bf16.msra.mxu0 0
        %711 = vmatprep.subr.bf16.mxu0 0
        %712 = vmatpush1.bf16.msra.mxu0 0
        %713 = vmatprep.subr.bf16.mxu0 0
        %714 = vmatpush1.bf16.msra.mxu0 0
        %715 = vmatprep.subr.bf16.mxu0 0
        %716 = vmatpush1.bf16.msra.mxu0 0
        %717 = vmatprep.subr.bf16.mxu0 0
        %718 = vmatpush1.bf16.msra.mxu0 0
        %719 = vmatprep.subr.bf16.mxu0 0
        %720 = vmatpush1.bf16.msra.mxu0 0
        %721 = vmatprep.subr.bf16.mxu0 0
        %722 = vmatpush1.bf16.msra.mxu0 0
        %723 = vmatprep.subr.bf16.mxu0 0
        %724 = vmatpush1.bf16.msra.mxu0 0
        %725 = vmatprep.subr.bf16.mxu0 0
        %726 = vmatpush1.bf16.msra.mxu0 0
        %727 = vmatprep.subr.bf16.mxu0 0
        %728 = vmatpush1.bf16.msra.mxu0 0
        %729 = vmatprep.mubr.bf16.mxu0 0
        %730 = vmatmul.mubr.bf16.gmra.mrb[0].mxu0 %v689
        %v731 = vpop.f32.mrb[0].mxu0
        %v732 = vadd.f32 0.0, %v731
        %v733 = vpop.f32.mrb[0].mxu0
        %v734 = vadd.f32 0.0, %v733
        %v735 = vpop.f32.mrb[0].mxu0
        %v736 = vpop.f32.mrb[0].mxu0
        %737 = vdwg.mxu0
        %v740 = vcombine.low %v732, %v734
        %v742 = vadd.f32 %v271, %v740
        %743 = vst [vmem:[%s267] sm:$0xff] %v742
        %s744 = sand.u32 %s141, 1
        %s745 = scalar_lea.sflag [#allocation4], %s744
        %s746 = sand.u32 %s141, 1
        %s747 = smul.addr %s746, 8
        %s748 = scalar_lea.vmem [#allocation8], %s747
        // Predicated region
        $region53: #{tpu_custom_call.1} parent=39 // pred_check
          %p749 = pneg %p151
        $region54: #{tpu_custom_call.1} parent=39 // pred_check_branch
          %751 = sbr.rel (%p749) target = $region56
        $region55: #{tpu_custom_call.1} parent=39 // pred_region
          %s752 = smul.u32 2, %s23
          %s754 = ssub.s32 128, 128
          %755 = vsyncadd %s745, %s754
          %s756 = smul.addr %s752, 64
          %s757 = scalar_lea.hbm %s5, %s756
          %s759 = sshll.u32 %s748, 4
          %s760 = int_to_ptr.vmem [resolvable:$true] %s759
          %762 = dma.vmem_to_hbm [thread:$0]  %s760, 128, %s757, %s745
        $region56: #{tpu_custom_call.1} parent=39 // pred_fallthru
          _
      $region40: #{tpu_custom_call.1} parent=5 // pred_fallthru
        _
      %p763 = scmp.le.s32.totalorder 2, %s18
      // Predicated region
      $region57: #{tpu_custom_call.1} parent=5 // pred_check
        %p764 = pneg %p763
      $region58: #{tpu_custom_call.1} parent=5 // pred_check_branch
        %766 = sbr.rel (%p764) target = $region60
      $region59: #{tpu_custom_call.1} parent=5 // pred_region
        %s767 = ssub.s32 %s18, 2
        // Predicated region
        $region61: #{tpu_custom_call.1} parent=59 // pred_check
          %p768 = pneg %p157
        $region62: #{tpu_custom_call.1} parent=59 // pred_check_branch
          %770 = sbr.rel (%p768) target = $region64
        $region63: #{tpu_custom_call.1} parent=59 // pred_region
          %s771 = sand.u32 %s142, 1
          %s772 = scalar_lea.sflag [#allocation4], %s771
          %s773 = sand.u32 %s142, 1
          %s774 = smul.addr %s773, 8
          %s775 = scalar_lea.vmem [#allocation8], %s774
          %776 = dma.done %s772, 128
        $region64: #{tpu_custom_call.1} parent=59 // pred_fallthru
          _
      $region60: #{tpu_custom_call.1} parent=5 // pred_fallthru
        _
    $region6: #{tpu_custom_call.1} parent=1 // loop_footer
      %s22 = sadd.s32 1, %s18
    $region7: #{tpu_custom_call.1} parent=1 // loop_footer_branch
      %17 = sbr.rel target = $region3
    $region8: #{tpu_custom_call.1} parent=1 // loop_exit
      _
    %777 = vsyncpa [#allocation3], 1
    %s778 = scalar_lea.sflag [#allocation3], 1
    %779 = vsyncpa %s778, 1
    %780 = vsyncpa [#allocation6], 1
    %781 = vsyncpa [#allocation4], 1
    %s782 = scalar_lea.sflag [#allocation4], 1
    %783 = vsyncpa %s782, 1

// kernel: tpu_custom_call.1
$region0: #{tpu_custom_call.1}
  #allocation0 [shape = 'u32[]', space=smem, size = 0x4, offset = 0x4, fixed_abs, tag = 'smem constant byte address 0x4 - core index']
  #allocation1 [shape = 'u32[144,128]{1,0:T(1,128)}', space=vmem, size = 0x12000, scoped, tag = 'internal scratch']
  %s0 = inlined_call_operand.hbm [shape: f32[4,512], index: 0, kind: input, shape index: {}]
  %s1 = inlined_call_operand.vmem [shape: bf16[4,36], index: 1, kind: input, shape index: {}]
  %s2 = inlined_call_operand.hbm [shape: bf16[4,36], index: 2, kind: input, shape index: {}]
  %s3 = inlined_call_operand.hbm [shape: f32[9,1,256], index: 3, kind: input, shape index: {}]
  %s4 = inlined_call_operand.vmem [shape: f32[4,4], index: 4, kind: input, shape index: {}]
  %s5 = inlined_call_operand.hbm [shape: f32[4,512], index: 5, kind: output, shape index: {}]
  %s6 = sld [smem:[#allocation0]]
  $region65: #{tpu_custom_call.1} parent=0
    _
  %s8 = ssub.s32 1, %s6
  %s9 = scalar_select 0, %s8, %s6
  $region1: #{tpu_custom_call.1} parent=0
    #allocation2 [shape = 'u8[8192]{0}', space=vmem, size = 0x2000, scoped, tag = 'input window, operand 0']
    #allocation3 [shape = 's32[2]{0}', space=sflag, size = 0x8, scoped, tag = 'scoped memory for tpu_custom_call.1']
    #allocation4 [shape = 's32[2]{0}', space=sflag, size = 0x8, scoped, tag = 'scoped memory for tpu_custom_call.1']
    #allocation5 [shape = 'u8[1024]{0}', space=vmem, size = 0x400, scoped, tag = 'input window, operand 2, single buffered']
    #allocation6 [shape = 's32[1]{0}', space=sflag, size = 0x4, scoped, tag = 'scoped memory for tpu_custom_call.1']
    #allocation7 [shape = 'u8[9216]{0}', space=vmem, size = 0x2400, scoped, tag = 'input window, operand 3, single buffered']
    #allocation8 [shape = 'u8[8192]{0}', space=vmem, size = 0x2000, scoped, tag = 'output window, operand 0']
    %10 = vsyncpa [#allocation3], 0
    %s11 = scalar_lea.sflag [#allocation3], 1
    %12 = vsyncpa %s11, 0
    %13 = vsyncpa [#allocation6], 0
    %14 = vsyncpa [#allocation4], 0
    %s15 = scalar_lea.sflag [#allocation4], 1
    %16 = vsyncpa %s15, 0
    loop: start=0, step=1, limit=4
    $region2: #{tpu_custom_call.1} parent=1 // loop_pre_header
      _
    $region3: #{tpu_custom_call.1} parent=1 // loop_header
      %s18 = sphi 0, %s22
      %p19 = scmp.ge.s32.totalorder %s18, 4
      %s28 = sphi 0, %s30
      %s31 = sphi 0, %s28
      %s32 = sphi 0, %s31
      %s48 = sphi 0, %s32
      %s52 = sphi 0, %s52
      %s54 = sphi 0, %s52
      %s55 = sphi 0, %s54
      %s69 = sphi 0, %s55
      %s73 = sphi 0, %s73
      %s75 = sphi 0, %s73
      %s76 = sphi 0, %s75
      %s90 = sphi 0, %s76
      %s94 = sphi 0, %s94
      %s96 = sphi 0, %s94
      %s97 = sphi 0, %s96
      %s111 = sphi 0, %s97
      %s115 = sphi 0, %s115
      %s117 = sphi 0, %s115
      %s118 = sphi 0, %s117
      %s132 = sphi 0, %s118
      %s138 = sphi 0, %s140
      %s141 = sphi 0, %s138
      %s142 = sphi 0, %s141
      %s158 = sphi 0, %s142
    $region4: #{tpu_custom_call.1} parent=1 // loop_header_branch
      %21 = sbr.rel (%p19) target = $region8
    $region5: #{tpu_custom_call.1} parent=1 // loop_body
      %s23 = ssub.s32 %s18, 1
      %s24 = ssub.s32 %s18, 2
      %s25 = sadd.s32 %s18, 1
      %s26 = ssub.s32 %s18, %s25
      %p27 = scmp.eq.s32.totalorder %s26, 0
      %s29 = sadd.s32 %s28, 1
      %s30 = scalar_select %p27, %s28, %s29
      %p33 = pneg %p27
      %p34 = scmp.eq.s32.totalorder %s18, 1
      %p35 = por %p33, %p34
      %p36 = scmp.ne.s32.totalorder %s28, %s31
      %p37 = scmp.eq.s32.totalorder %s18, 0
      %p38 = por %p36, %p37
      %p39 = scmp.ne.s32.totalorder %s28, %s31
      %p40 = scmp.eq.s32.totalorder %s23, 1
      %p41 = por %p39, %p40
      %p42 = scmp.ne.s32.totalorder %s31, %s32
      %p43 = scmp.eq.s32.totalorder %s23, 0
      %p44 = por %p42, %p43
      %p45 = scmp.ne.s32.totalorder %s31, %s32
      %p46 = scmp.eq.s32.totalorder %s24, 1
      %p47 = por %p45, %p46
      %p49 = scmp.ne.s32.totalorder %s32, %s48
      %p50 = scmp.eq.s32.totalorder %s24, 0
      %p51 = por %p49, %p50
      %s53 = sadd.s32 %s52, 1
      %p56 = scmp.eq.s32.totalorder %s18, 1
      %p57 = scmp.ne.s32.totalorder %s52, %s54
      %p58 = scmp.eq.s32.totalorder %s18, 0
      %p59 = por %p57, %p58
      %p60 = scmp.ne.s32.totalorder %s52, %s54
      %p61 = scmp.eq.s32.totalorder %s23, 1
      %p62 = por %p60, %p61
      %p63 = scmp.ne.s32.totalorder %s54, %s55
      %p64 = scmp.eq.s32.totalorder %s23, 0
      %p65 = por %p63, %p64
      %p66 = scmp.ne.s32.totalorder %s54, %s55
      %p67 = scmp.eq.s32.totalorder %s24, 1
      %p68 = por %p66, %p67
      %p70 = scmp.ne.s32.totalorder %s55, %s69
      %p71 = scmp.eq.s32.totalorder %s24, 0
      %p72 = por %p70, %p71
      %s74 = sadd.s32 %s73, 1
      %p77 = scmp.eq.s32.totalorder %s18, 1
      %p78 = scmp.ne.s32.totalorder %s73, %s75
      %p79 = scmp.eq.s32.totalorder %s18, 0
      %p80 = por %p78, %p79
      %p81 = scmp.ne.s32.totalorder %s73, %s75
      %p82 = scmp.eq.s32.totalorder %s23, 1
      %p83 = por %p81, %p82
      %p84 = scmp.ne.s32.totalorder %s75, %s76
      %p85 = scmp.eq.s32.totalorder %s23, 0
      %p86 = por %p84, %p85
      %p87 = scmp.ne.s32.totalorder %s75, %s76
      %p88 = scmp.eq.s32.totalorder %s24, 1
      %p89 = por %p87, %p88
      %p91 = scmp.ne.s32.totalorder %s76, %s90
      %p92 = scmp.eq.s32.totalorder %s24, 0
      %p93 = por %p91, %p92
      %s95 = sadd.s32 %s94, 1
      %p98 = scmp.eq.s32.totalorder %s18, 1
      %p99 = scmp.ne.s32.totalorder %s94, %s96
      %p100 = scmp.eq.s32.totalorder %s18, 0
      %p101 = por %p99, %p100
      %p102 = scmp.ne.s32.totalorder %s94, %s96
      %p103 = scmp.eq.s32.totalorder %s23, 1
      %p104 = por %p102, %p103
      %p105 = scmp.ne.s32.totalorder %s96, %s97
      %p106 = scmp.eq.s32.totalorder %s23, 0
      %p107 = por %p105, %p106
      %p108 = scmp.ne.s32.totalorder %s96, %s97
      %p109 = scmp.eq.s32.totalorder %s24, 1
      %p110 = por %p108, %p109
      %p112 = scmp.ne.s32.totalorder %s97, %s111
      %p113 = scmp.eq.s32.totalorder %s24, 0
      %p114 = por %p112, %p113
      %s116 = sadd.s32 %s115, 1
      %p119 = scmp.eq.s32.totalorder %s18, 1
      %p120 = scmp.ne.s32.totalorder %s115, %s117
      %p121 = scmp.eq.s32.totalorder %s18, 0
      %p122 = por %p120, %p121
      %p123 = scmp.ne.s32.totalorder %s115, %s117
      %p124 = scmp.eq.s32.totalorder %s23, 1
      %p125 = por %p123, %p124
      %p126 = scmp.ne.s32.totalorder %s117, %s118
      %p127 = scmp.eq.s32.totalorder %s23, 0
      %p128 = por %p126, %p127
      %p129 = scmp.ne.s32.totalorder %s117, %s118
      %p130 = scmp.eq.s32.totalorder %s24, 1
      %p131 = por %p129, %p130
      %p133 = scmp.ne.s32.totalorder %s118, %s132
      %p134 = scmp.eq.s32.totalorder %s24, 0
      %p135 = por %p133, %p134
      %s136 = ssub.s32 %s18, %s25
      %p137 = scmp.eq.s32.totalorder %s136, 0
      %s139 = sadd.s32 %s138, 1
      %s140 = scalar_select %p137, %s138, %s139
      %p143 = pneg %p137
      %p144 = scmp.eq.s32.totalorder %s18, 1
      %p145 = por %p143, %p144
      %p146 = scmp.ne.s32.totalorder %s138, %s141
      %p147 = scmp.eq.s32.totalorder %s18, 0
      %p148 = por %p146, %p147
      %p149 = scmp.ne.s32.totalorder %s138, %s141
      %p150 = scmp.eq.s32.totalorder %s23, 1
      %p151 = por %p149, %p150
      %p152 = scmp.ne.s32.totalorder %s141, %s142
      %p153 = scmp.eq.s32.totalorder %s23, 0
      %p154 = por %p152, %p153
      %p155 = scmp.ne.s32.totalorder %s141, %s142
      %p156 = scmp.eq.s32.totalorder %s24, 1
      %p157 = por %p155, %p156
      %p159 = scmp.ne.s32.totalorder %s142, %s158
      %p160 = scmp.eq.s32.totalorder %s24, 0
      %p161 = por %p159, %p160
      %p162 = scmp.le.s32.totalorder 1, %s18
      %p163 = scmp.lt.s32.totalorder %s18, 3
      %p164 = pnand %p162, %p163
      %p165 = pneg %p164
      // Predicated region
      $region9: #{tpu_custom_call.1} parent=5 // pred_check
        _
      $region10: #{tpu_custom_call.1} parent=5 // pred_check_branch
        %167 = sbr.rel (%p164) target = $region12
      $region11: #{tpu_custom_call.1} parent=5 // pred_region
        %s168 = ssub.s32 %s18, 1
        // Predicated region
        $region13: #{tpu_custom_call.1} parent=11 // pred_check
          %p169 = pneg %p65
        $region14: #{tpu_custom_call.1} parent=11 // pred_check_branch
          %171 = sbr.rel (%p169) target = $region16
        $region15: #{tpu_custom_call.1} parent=11 // pred_region
          _
        $region16: #{tpu_custom_call.1} parent=11 // pred_fallthru
          _
        // Predicated region
        $region17: #{tpu_custom_call.1} parent=11 // pred_check
          %p172 = pneg %p86
        $region18: #{tpu_custom_call.1} parent=11 // pred_check_branch
          %174 = sbr.rel (%p172) target = $region20
        $region19: #{tpu_custom_call.1} parent=11 // pred_region
          %s176 = ssub.s32 32, 32
          %177 = vsyncadd [#allocation6], %s176
          %s179 = sshll.u32 [#allocation5], 4
          %s180 = int_to_ptr.vmem [resolvable:$true] %s179
          %182 = dma.hbm_to_vmem [thread:$0]  %s2, 32, %s180, [#allocation6]
        $region20: #{tpu_custom_call.1} parent=11 // pred_fallthru
          _
        // Predicated region
        $region21: #{tpu_custom_call.1} parent=11 // pred_check
          %p183 = pneg %p107
        $region22: #{tpu_custom_call.1} parent=11 // pred_check_branch
          %185 = sbr.rel (%p183) target = $region24
        $region23: #{tpu_custom_call.1} parent=11 // pred_region
          %s187 = ssub.s32 288, 288
          %188 = vsyncadd [#allocation6], %s187
          %s189 = sshll.u32 [#allocation7], 4
          %s190 = int_to_ptr.vmem [resolvable:$true] %s189
          %195 = dma.hbm_to_vmem [thread:$0]  %s3, 288, %s190, [#allocation6], 32, 32, 2
        $region24: #{tpu_custom_call.1} parent=11 // pred_fallthru
          _
        // Predicated region
        $region25: #{tpu_custom_call.1} parent=11 // pred_check
          %p196 = pneg %p128
        $region26: #{tpu_custom_call.1} parent=11 // pred_check_branch
          %198 = sbr.rel (%p196) target = $region28
        $region27: #{tpu_custom_call.1} parent=11 // pred_region
          _
        $region28: #{tpu_custom_call.1} parent=11 // pred_fallthru
          _
      $region12: #{tpu_custom_call.1} parent=5 // pred_fallthru
        _
      %p199 = scmp.lt.s32.totalorder %s18, 2
      // Predicated region
      $region29: #{tpu_custom_call.1} parent=5 // pred_check
        %p200 = pneg %p199
      $region30: #{tpu_custom_call.1} parent=5 // pred_check_branch
        %202 = sbr.rel (%p200) target = $region32
      $region31: #{tpu_custom_call.1} parent=5 // pred_region
        // Predicated region
        $region33: #{tpu_custom_call.1} parent=31 // pred_check
          %p203 = pneg %p38
        $region34: #{tpu_custom_call.1} parent=31 // pred_check_branch
          %205 = sbr.rel (%p203) target = $region36
        $region35: #{tpu_custom_call.1} parent=31 // pred_region
          %s206 = sand.u32 %s28, 1
          %s207 = scalar_lea.sflag [#allocation3], %s206
          %s208 = sand.u32 %s28, 1
          %s209 = smul.addr %s208, 8
          %s210 = scalar_lea.vmem [#allocation2], %s209
          %s211 = smul.u32 2, %s18
          %s213 = ssub.s32 128, 128
          %214 = vsyncadd %s207, %s213
          %s215 = smul.addr %s211, 64
          %s216 = scalar_lea.hbm %s0, %s215
          %s218 = sshll.u32 %s210, 4
          %s219 = int_to_ptr.vmem [resolvable:$true] %s218
          %221 = dma.hbm_to_vmem [thread:$0]  %s216, 128, %s219, %s207
        $region36: #{tpu_custom_call.1} parent=31 // pred_fallthru
          _
      $region32: #{tpu_custom_call.1} parent=5 // pred_fallthru
        _
      %p222 = scmp.le.s32.totalorder 1, %s18
      %p223 = scmp.lt.s32.totalorder %s18, 3
      %p224 = pnand %p222, %p223
      %p225 = pneg %p224
      // Predicated region
      $region37: #{tpu_custom_call.1} parent=5 // pred_check
        _
      $region38: #{tpu_custom_call.1} parent=5 // pred_check_branch
        %227 = sbr.rel (%p224) target = $region40
      $region39: #{tpu_custom_call.1} parent=5 // pred_region
        %s228 = ssub.s32 %s18, 1
        %s229 = sand.u32 %s31, 1
        %s230 = scalar_lea.sflag [#allocation3], %s229
        %s231 = sand.u32 %s31, 1
        %s232 = smul.addr %s231, 8
        %s233 = scalar_lea.vmem [#allocation2], %s232
        // Predicated region
        $region41: #{tpu_custom_call.1} parent=39 // pred_check
          %p234 = pneg %p44
        $region42: #{tpu_custom_call.1} parent=39 // pred_check_branch
          %236 = sbr.rel (%p234) target = $region44
        $region43: #{tpu_custom_call.1} parent=39 // pred_region
          %237 = dma.done %s230, 128
        $region44: #{tpu_custom_call.1} parent=39 // pred_fallthru
          _
        // Predicated region
        $region45: #{tpu_custom_call.1} parent=39 // pred_check
          %p238 = pneg %p86
        $region46: #{tpu_custom_call.1} parent=39 // pred_check_branch
          %240 = sbr.rel (%p238) target = $region48
        $region47: #{tpu_custom_call.1} parent=39 // pred_region
          %241 = dma.done [#allocation6], 32
        $region48: #{tpu_custom_call.1} parent=39 // pred_fallthru
          _
        // Predicated region
        $region49: #{tpu_custom_call.1} parent=39 // pred_check
          %p242 = pneg %p107
        $region50: #{tpu_custom_call.1} parent=39 // pred_check_branch
          %244 = sbr.rel (%p242) target = $region52
        $region51: #{tpu_custom_call.1} parent=39 // pred_region
          %245 = dma.done [#allocation6], 288
        $region52: #{tpu_custom_call.1} parent=39 // pred_fallthru
          _
        %s246 = sand.u32 %s31, 1
        %s247 = scalar_lea.sflag [#allocation3], %s246
        %s248 = sand.u32 %s31, 1
        %s249 = smul.addr %s248, 8
        %s250 = scalar_lea.vmem [#allocation2], %s249
        %p251 = pneg %p44
        %p252 = pneg %p41
        %p253 = pneg %p65
        %p254 = pneg %p62
        %p255 = pneg %p86
        %p256 = pneg %p83
        %p257 = pneg %p107
        %p258 = pneg %p104
        %p259 = pneg %p128
        %p260 = pneg %p125
        %p261 = pneg %p154
        %p262 = pneg %p151
        %s263 = sand.u32 %s141, 1
        %s264 = scalar_lea.sflag [#allocation4], %s263
        %s265 = sand.u32 %s141, 1
        %s266 = smul.addr %s265, 8
        %s267 = scalar_lea.vmem [#allocation8], %s266
        %s268 = smul.u32 2, %s23
        %s269 = smul.u32 2, %s23
        %v271 = vld [vmem:[%s233] sm:$0xff]
        %v272 = vld [vmem:[%s4] sm:$0xf]
        %274 = vset.pattern.permute.xlu0 0
        %275 = vperm.xlu0 %274, %v272
        %v276 = vpop.permute.xlu0 %275
        %v278 = vunpack.c.l.s4 839922192
        %v279 = vunpack.c.0.s8 %v278
        %v280 = vlaneseq
        %v281 = vshrl.u32 %v280, 7
        %v282 = vsub.s32 %v279, %v281
        %v283 = vrot.slane %v276, %v282
        %v285 = vmul.f32 %v271, %v283
        %286 = vset.pattern.permute.xlu0 1
        %287 = vperm.xlu0 %286, %v272
        %v288 = vpop.permute.xlu0 %287
        %v290 = vunpack.c.l.s4 839922192
        %v291 = vunpack.c.0.s8 %v290
        %v292 = vlaneseq
        %v293 = vshrl.u32 %v292, 7
        %v294 = vsub.s32 %v291, %v293
        %v295 = vrot.slane %v288, %v294
        %v297 = vadd.f32 %v285, %v295
        %v298 = vmax.f32 %v297, 0.0
        %v300 = vcombine.high %v298, %v298
        %302 = vrot.lane.b32.xlu0 %v298, 17
        %v303 = vpop.permute.xlu0 %302
        %304 = vrot.lane.b32.xlu0 %v300, 17
        %v305 = vpop.permute.xlu0 %304
        %v306 = vlaneseq
        %v307 = vand.u32 %v306, 127
        %vm308 = vcmp.lt.s32.totalorder %v307, 17
        %v309 = vsel %vm308, %v303, %v305
        %v310 = vsel %vm308, %v305, %v303
        %v311 = vld [vmem:[#allocation7] sm:$0x3]
        %v313 = vlaneseq
        %v314 = vshrl.u32 %v313, 7
        %v315 = vsub.s32 0, %v314
        %v316 = vrot.slane %v311, %v315
        %v317 = vlaneseq
        %v318 = vshrl.u32 %v317, 7
        %v319 = vsub.s32 1, %v318
        %v320 = vrot.slane %v311, %v319
        %v323 = vmul.f32 %v310, %v316
        %v324 = vmul.f32 %v309, %v320
        %325 = vrot.lane.b32.xlu0 %v298, 16
        %v326 = vpop.permute.xlu0 %325
        %327 = vrot.lane.b32.xlu0 %v300, 16
        %v328 = vpop.permute.xlu0 %327
        %vm329 = vcmp.lt.s32.totalorder %v307, 16
        %v330 = vsel %vm329, %v326, %v328
        %v331 = vsel %vm329, %v328, %v326
        %s332 = scalar_lea.vmem [#allocation7], 2
        %v333 = vld [vmem:[%s332] sm:$0x3]
        %v335 = vlaneseq
        %v336 = vshrl.u32 %v335, 7
        %v337 = vsub.s32 0, %v336
        %v338 = vrot.slane %v333, %v337
        %v339 = vlaneseq
        %v340 = vshrl.u32 %v339, 7
        %v341 = vsub.s32 1, %v340
        %v342 = vrot.slane %v333, %v341
        %v345 = vmul.f32 %v331, %v338
        %v346 = vmul.f32 %v330, %v342
        %347 = vrot.lane.b32.xlu0 %v298, 15
        %v348 = vpop.permute.xlu0 %347
        %349 = vrot.lane.b32.xlu0 %v300, 15
        %v350 = vpop.permute.xlu0 %349
        %vm351 = vcmp.lt.s32.totalorder %v307, 15
        %v352 = vsel %vm351, %v348, %v350
        %v353 = vsel %vm351, %v350, %v348
        %s354 = scalar_lea.vmem [#allocation7], 4
        %v355 = vld [vmem:[%s354] sm:$0x3]
        %v357 = vlaneseq
        %v358 = vshrl.u32 %v357, 7
        %v359 = vsub.s32 0, %v358
        %v360 = vrot.slane %v355, %v359
        %v361 = vlaneseq
        %v362 = vshrl.u32 %v361, 7
        %v363 = vsub.s32 1, %v362
        %v364 = vrot.slane %v355, %v363
        %v367 = vmul.f32 %v353, %v360
        %v368 = vmul.f32 %v352, %v364
        %369 = vrot.lane.b32.xlu0 %v298, 1
        %v370 = vpop.permute.xlu0 %369
        %371 = vrot.lane.b32.xlu0 %v300, 1
        %v372 = vpop.permute.xlu0 %371
        %vm373 = vcmp.lt.s32.totalorder %v307, 1
        %v374 = vsel %vm373, %v370, %v372
        %v375 = vsel %vm373, %v372, %v370
        %s376 = scalar_lea.vmem [#allocation7], 6
        %v377 = vld [vmem:[%s376] sm:$0x3]
        %v379 = vlaneseq
        %v380 = vshrl.u32 %v379, 7
        %v381 = vsub.s32 0, %v380
        %v382 = vrot.slane %v377, %v381
        %v383 = vlaneseq
        %v384 = vshrl.u32 %v383, 7
        %v385 = vsub.s32 1, %v384
        %v386 = vrot.slane %v377, %v385
        %v389 = vmul.f32 %v375, %v382
        %v390 = vmul.f32 %v374, %v386
        %391 = vrot.lane.b32.xlu0 %v298, 127
        %v392 = vpop.permute.xlu0 %391
        %393 = vrot.lane.b32.xlu0 %v300, 127
        %v394 = vpop.permute.xlu0 %393
        %vm395 = vcmp.lt.s32.totalorder %v307, 127
        %v396 = vsel %vm395, %v392, %v394
        %v397 = vsel %vm395, %v394, %v392
        %s398 = scalar_lea.vmem [#allocation7], 10
        %v399 = vld [vmem:[%s398] sm:$0x3]
        %v401 = vlaneseq
        %v402 = vshrl.u32 %v401, 7
        %v403 = vsub.s32 0, %v402
        %v404 = vrot.slane %v399, %v403
        %v405 = vlaneseq
        %v406 = vshrl.u32 %v405, 7
        %v407 = vsub.s32 1, %v406
        %v408 = vrot.slane %v399, %v407
        %v411 = vmul.f32 %v396, %v404
        %v412 = vmul.f32 %v397, %v408
        %413 = vrot.lane.b32.xlu0 %v298, 113
        %v414 = vpop.permute.xlu0 %413
        %415 = vrot.lane.b32.xlu0 %v300, 113
        %v416 = vpop.permute.xlu0 %415
        %vm417 = vcmp.lt.s32.totalorder %v307, 113
        %v418 = vsel %vm417, %v414, %v416
        %v419 = vsel %vm417, %v416, %v414
        %s420 = scalar_lea.vmem [#allocation7], 12
        %v421 = vld [vmem:[%s420] sm:$0x3]
        %v423 = vlaneseq
        %v424 = vshrl.u32 %v423, 7
        %v425 = vsub.s32 0, %v424
        %v426 = vrot.slane %v421, %v425
        %v427 = vlaneseq
        %v428 = vshrl.u32 %v427, 7
        %v429 = vsub.s32 1, %v428
        %v430 = vrot.slane %v421, %v429
        %v433 = vmul.f32 %v418, %v426
        %v434 = vmul.f32 %v419, %v430
        %435 = vrot.lane.b32.xlu0 %v298, 112
        %v436 = vpop.permute.xlu0 %435
        %437 = vrot.lane.b32.xlu0 %v300, 112
        %v438 = vpop.permute.xlu0 %437
        %vm439 = vcmp.lt.s32.totalorder %v307, 112
        %v440 = vsel %vm439, %v436, %v438
        %v441 = vsel %vm439, %v438, %v436
        %s442 = scalar_lea.vmem [#allocation7], 14
        %v443 = vld [vmem:[%s442] sm:$0x3]
        %v445 = vlaneseq
        %v446 = vshrl.u32 %v445, 7
        %v447 = vsub.s32 0, %v446
        %v448 = vrot.slane %v443, %v447
        %v449 = vlaneseq
        %v450 = vshrl.u32 %v449, 7
        %v451 = vsub.s32 1, %v450
        %v452 = vrot.slane %v443, %v451
        %v455 = vmul.f32 %v440, %v448
        %v456 = vmul.f32 %v441, %v452
        %457 = vrot.lane.b32.xlu0 %v298, 111
        %v458 = vpop.permute.xlu0 %457
        %459 = vrot.lane.b32.xlu0 %v300, 111
        %v460 = vpop.permute.xlu0 %459
        %vm461 = vcmp.lt.s32.totalorder %v307, 111
        %v462 = vsel %vm461, %v458, %v460
        %v463 = vsel %vm461, %v460, %v458
        %s464 = scalar_lea.vmem [#allocation7], 16
        %v465 = vld [vmem:[%s464] sm:$0x3]
        %v467 = vlaneseq
        %v468 = vshrl.u32 %v467, 7
        %v469 = vsub.s32 0, %v468
        %v470 = vrot.slane %v465, %v469
        %v471 = vlaneseq
        %v472 = vshrl.u32 %v471, 7
        %v473 = vsub.s32 1, %v472
        %v474 = vrot.slane %v465, %v473
        %v477 = vmul.f32 %v462, %v470
        %v478 = vmul.f32 %v463, %v474
        %v481 = vrot.slane %v345, 4
        %v482 = vrot.slane %v346, 4
        %v487 = vrot.slane %v389, 4
        %v488 = vrot.slane %v390, 4
        %v493 = vrot.slane %v411, 4
        %v494 = vrot.slane %v412, 4
        %v499 = vrot.slane %v455, 4
        %v500 = vrot.slane %v456, 4
        %vm503 = vcmask 1043456
        %v504 = vsel %vm503, %v323, %v481
        %v505 = vsel %vm503, %v324, %v482
        %v506 = vsel %vm503, %v367, %v487
        %v507 = vsel %vm503, %v368, %v488
        %v508 = vsel %vm503, %v298, %v493
        %v509 = vsel %vm503, %v300, %v494
        %v510 = vsel %vm503, %v433, %v499
        %v511 = vsel %vm503, %v434, %v500
        %v512 = vpack.c.bf16 %v506, %v504
        %v513 = vpack.c.bf16 %v507, %v505
        %v514 = vpack.c.bf16 %v510, %v508
        %v515 = vpack.c.bf16 %v511, %v509
        %v516 = vpack.c.bf16 %v477, %v477
        %v517 = vpack.c.bf16 %v478, %v478
        %v518 = vld [vmem:[%s1] sm:$0x3]
        %vm519 = vcmask 293888
        %v521 = vsel %vm519, %v518, 0
        %vm523 = vcmask 1041408
        %v525 = vsel %vm523, %v516, 0
        %v528 = vsel %vm523, %v517, 0
        %530 = vmatprep.subr.bf16.mxu0 %v513
        %531 = vmatpush1.bf16.msra.mxu0 %v512
        %532 = vmatprep.subr.bf16.mxu0 %v515
        %533 = vmatpush1.bf16.msra.mxu0 %v514
        %534 = vmatprep.subr.bf16.mxu0 %v528
        %535 = vmatpush1.bf16.msra.mxu0 %v525
        %536 = vmatprep.subr.bf16.mxu0 0
        %537 = vmatpush1.bf16.msra.mxu0 0
        %538 = vmatprep.subr.bf16.mxu0 0
        %539 = vmatpush1.bf16.msra.mxu0 0
        %540 = vmatprep.subr.bf16.mxu0 0
        %541 = vmatpush1.bf16.msra.mxu0 0
        %542 = vmatprep.subr.bf16.mxu0 0
        %543 = vmatpush1.bf16.msra.mxu0 0
        %544 = vmatprep.subr.bf16.mxu0 0
        %545 = vmatpush1.bf16.msra.mxu0 0
        %546 = vmatprep.subr.bf16.mxu0 0
        %547 = vmatpush1.bf16.msra.mxu0 0
        %548 = vmatprep.subr.bf16.mxu0 0
        %549 = vmatpush1.bf16.msra.mxu0 0
        %550 = vmatprep.subr.bf16.mxu0 0
        %551 = vmatpush1.bf16.msra.mxu0 0
        %552 = vmatprep.subr.bf16.mxu0 0
        %553 = vmatpush1.bf16.msra.mxu0 0
        %554 = vmatprep.subr.bf16.mxu0 0
        %555 = vmatpush1.bf16.msra.mxu0 0
        %556 = vmatprep.subr.bf16.mxu0 0
        %557 = vmatpush1.bf16.msra.mxu0 0
        %558 = vmatprep.subr.bf16.mxu0 0
        %559 = vmatpush1.bf16.msra.mxu0 0
        %560 = vmatprep.subr.bf16.mxu0 0
        %561 = vmatpush1.bf16.msra.mxu0 0
        %562 = vmatprep.mubr.bf16.mxu0 0
        %563 = vmatmul.mubr.bf16.gmra.mrb[0].mxu0 %v521
        %v564 = vpop.f32.mrb[0].mxu0
        %v565 = vadd.f32 0.0, %v564
        %v566 = vpop.f32.mrb[0].mxu0
        %v567 = vadd.f32 0.0, %v566
        %v568 = vpop.f32.mrb[0].mxu0
        %v569 = vpop.f32.mrb[0].mxu0
        %570 = vdwg.mxu0
        %571 = vset.pattern.permute.xlu0 2
        %572 = vperm.xlu0 %571, %v272
        %v573 = vpop.permute.xlu0 %572
        %v575 = vmul.f32 %v565, %v573
        %v576 = vmul.f32 %v567, %v573
        %577 = vset.pattern.permute.xlu0 3
        %578 = vperm.xlu0 %577, %v272
        %v579 = vpop.permute.xlu0 %578
        %v581 = vadd.f32 %v575, %v579
        %v582 = vadd.f32 %v576, %v579
        %v583 = vmax.f32 %v581, 0.0
        %v584 = vmax.f32 %v582, 0.0
        %585 = vrot.lane.b32.xlu0 %v583, 17
        %v586 = vpop.permute.xlu0 %585
        %587 = vrot.lane.b32.xlu0 %v584, 17
        %v588 = vpop.permute.xlu0 %587
        %v589 = vsel %vm308, %v586, %v588
        %v590 = vsel %vm308, %v588, %v586
        %v591 = vmul.f32 %v590, %v316
        %v592 = vmul.f32 %v589, %v320
        %593 = vrot.lane.b32.xlu0 %v583, 16
        %v594 = vpop.permute.xlu0 %593
        %595 = vrot.lane.b32.xlu0 %v584, 16
        %v596 = vpop.permute.xlu0 %595
        %v597 = vsel %vm329, %v594, %v596
        %v598 = vsel %vm329, %v596, %v594
        %v599 = vmul.f32 %v598, %v338
        %v600 = vmul.f32 %v597, %v342
        %601 = vrot.lane.b32.xlu0 %v583, 15
        %v602 = vpop.permute.xlu0 %601
        %603 = vrot.lane.b32.xlu0 %v584, 15
        %v604 = vpop.permute.xlu0 %603
        %v605 = vsel %vm351, %v602, %v604
        %v606 = vsel %vm351, %v604, %v602
        %v607 = vmul.f32 %v606, %v360
        %v608 = vmul.f32 %v605, %v364
        %609 = vrot.lane.b32.xlu0 %v583, 1
        %v610 = vpop.permute.xlu0 %609
        %611 = vrot.lane.b32.xlu0 %v584, 1
        %v612 = vpop.permute.xlu0 %611
        %v613 = vsel %vm373, %v610, %v612
        %v614 = vsel %vm373, %v612, %v610
        %v615 = vmul.f32 %v614, %v382
        %v616 = vmul.f32 %v613, %v386
        %617 = vrot.lane.b32.xlu0 %v583, 127
        %v618 = vpop.permute.xlu0 %617
        %619 = vrot.lane.b32.xlu0 %v584, 127
        %v620 = vpop.permute.xlu0 %619
        %v621 = vsel %vm395, %v618, %v620
        %v622 = vsel %vm395, %v620, %v618
        %v623 = vmul.f32 %v621, %v404
        %v624 = vmul.f32 %v622, %v408
        %625 = vrot.lane.b32.xlu0 %v583, 113
        %v626 = vpop.permute.xlu0 %625
        %627 = vrot.lane.b32.xlu0 %v584, 113
        %v628 = vpop.permute.xlu0 %627
        %v629 = vsel %vm417, %v626, %v628
        %v630 = vsel %vm417, %v628, %v626
        %v631 = vmul.f32 %v629, %v426
        %v632 = vmul.f32 %v630, %v430
        %633 = vrot.lane.b32.xlu0 %v583, 112
        %v634 = vpop.permute.xlu0 %633
        %635 = vrot.lane.b32.xlu0 %v584, 112
        %v636 = vpop.permute.xlu0 %635
        %v637 = vsel %vm439, %v634, %v636
        %v638 = vsel %vm439, %v636, %v634
        %v639 = vmul.f32 %v637, %v448
        %v640 = vmul.f32 %v638, %v452
        %641 = vrot.lane.b32.xlu0 %v583, 111
        %v642 = vpop.permute.xlu0 %641
        %643 = vrot.lane.b32.xlu0 %v584, 111
        %v644 = vpop.permute.xlu0 %643
        %v645 = vsel %vm461, %v642, %v644
        %v646 = vsel %vm461, %v644, %v642
        %v647 = vmul.f32 %v645, %v470
        %v648 = vmul.f32 %v646, %v474
        %v651 = vrot.slane %v599, 4
        %v652 = vrot.slane %v600, 4
        %v657 = vrot.slane %v615, 4
        %v658 = vrot.slane %v616, 4
        %v663 = vrot.slane %v623, 4
        %v664 = vrot.slane %v624, 4
        %v669 = vrot.slane %v639, 4
        %v670 = vrot.slane %v640, 4
        %v673 = vsel %vm503, %v591, %v651
        %v674 = vsel %vm503, %v592, %v652
        %v675 = vsel %vm503, %v607, %v657
        %v676 = vsel %vm503, %v608, %v658
        %v677 = vsel %vm503, %v583, %v663
        %v678 = vsel %vm503, %v584, %v664
        %v679 = vsel %vm503, %v631, %v669
        %v680 = vsel %vm503, %v632, %v670
        %v681 = vpack.c.bf16 %v675, %v673
        %v682 = vpack.c.bf16 %v676, %v674
        %v683 = vpack.c.bf16 %v679, %v677
        %v684 = vpack.c.bf16 %v680, %v678
        %v685 = vpack.c.bf16 %v647, %v647
        %v686 = vpack.c.bf16 %v648, %v648
        %v687 = vld [vmem:[#allocation5] sm:$0x3]
        %v689 = vsel %vm519, %v687, 0
        %v692 = vsel %vm523, %v685, 0
        %v695 = vsel %vm523, %v686, 0
        %697 = vmatprep.subr.bf16.mxu0 %v682
        %698 = vmatpush1.bf16.msra.mxu0 %v681
        %699 = vmatprep.subr.bf16.mxu0 %v684
        %700 = vmatpush1.bf16.msra.mxu0 %v683
        %701 = vmatprep.subr.bf16.mxu0 %v695
        %702 = vmatpush1.bf16.msra.mxu0 %v692
        %703 = vmatprep.subr.bf16.mxu0 0
        %704 = vmatpush1.bf16.msra.mxu0 0
        %705 = vmatprep.subr.bf16.mxu0 0
        %706 = vmatpush1.bf16.msra.mxu0 0
        %707 = vmatprep.subr.bf16.mxu0 0
        %708 = vmatpush1.bf16.msra.mxu0 0
        %709 = vmatprep.subr.bf16.mxu0 0
        %710 = vmatpush1.bf16.msra.mxu0 0
        %711 = vmatprep.subr.bf16.mxu0 0
        %712 = vmatpush1.bf16.msra.mxu0 0
        %713 = vmatprep.subr.bf16.mxu0 0
        %714 = vmatpush1.bf16.msra.mxu0 0
        %715 = vmatprep.subr.bf16.mxu0 0
        %716 = vmatpush1.bf16.msra.mxu0 0
        %717 = vmatprep.subr.bf16.mxu0 0
        %718 = vmatpush1.bf16.msra.mxu0 0
        %719 = vmatprep.subr.bf16.mxu0 0
        %720 = vmatpush1.bf16.msra.mxu0 0
        %721 = vmatprep.subr.bf16.mxu0 0
        %722 = vmatpush1.bf16.msra.mxu0 0
        %723 = vmatprep.subr.bf16.mxu0 0
        %724 = vmatpush1.bf16.msra.mxu0 0
        %725 = vmatprep.subr.bf16.mxu0 0
        %726 = vmatpush1.bf16.msra.mxu0 0
        %727 = vmatprep.subr.bf16.mxu0 0
        %728 = vmatpush1.bf16.msra.mxu0 0
        %729 = vmatprep.mubr.bf16.mxu0 0
        %730 = vmatmul.mubr.bf16.gmra.mrb[0].mxu0 %v689
        %v731 = vpop.f32.mrb[0].mxu0
        %v732 = vadd.f32 0.0, %v731
        %v733 = vpop.f32.mrb[0].mxu0
        %v734 = vadd.f32 0.0, %v733
        %v735 = vpop.f32.mrb[0].mxu0
        %v736 = vpop.f32.mrb[0].mxu0
        %737 = vdwg.mxu0
        %v740 = vcombine.low %v732, %v734
        %v742 = vadd.f32 %v271, %v740
        %743 = vst [vmem:[%s267] sm:$0xff] %v742
        %s744 = sand.u32 %s141, 1
        %s745 = scalar_lea.sflag [#allocation4], %s744
        %s746 = sand.u32 %s141, 1
        %s747 = smul.addr %s746, 8
        %s748 = scalar_lea.vmem [#allocation8], %s747
        // Predicated region
        $region53: #{tpu_custom_call.1} parent=39 // pred_check
          %p749 = pneg %p151
        $region54: #{tpu_custom_call.1} parent=39 // pred_check_branch
          %751 = sbr.rel (%p749) target = $region56
        $region55: #{tpu_custom_call.1} parent=39 // pred_region
          %s752 = smul.u32 2, %s23
          %s754 = ssub.s32 128, 128
          %755 = vsyncadd %s745, %s754
          %s756 = smul.addr %s752, 64
          %s757 = scalar_lea.hbm %s5, %s756
          %s759 = sshll.u32 %s748, 4
          %s760 = int_to_ptr.vmem [resolvable:$true] %s759
          %762 = dma.vmem_to_hbm [thread:$0]  %s760, 128, %s757, %s745
        $region56: #{tpu_custom_call.1} parent=39 // pred_fallthru
          _
      $region40: #{tpu_custom_call.1} parent=5 // pred_fallthru
        _
      %p763 = scmp.le.s32.totalorder 2, %s18
      // Predicated region
      $region57: #{tpu_custom_call.1} parent=5 // pred_check
        %p764 = pneg %p763
      $region58: #{tpu_custom_call.1} parent=5 // pred_check_branch
        %766 = sbr.rel (%p764) target = $region60
      $region59: #{tpu_custom_call.1} parent=5 // pred_region
        %s767 = ssub.s32 %s18, 2
        // Predicated region
        $region61: #{tpu_custom_call.1} parent=59 // pred_check
          %p768 = pneg %p157
        $region62: #{tpu_custom_call.1} parent=59 // pred_check_branch
          %770 = sbr.rel (%p768) target = $region64
        $region63: #{tpu_custom_call.1} parent=59 // pred_region
          %s771 = sand.u32 %s142, 1
          %s772 = scalar_lea.sflag [#allocation4], %s771
          %s773 = sand.u32 %s142, 1
          %s774 = smul.addr %s773, 8
          %s775 = scalar_lea.vmem [#allocation8], %s774
          %776 = dma.done %s772, 128
        $region64: #{tpu_custom_call.1} parent=59 // pred_fallthru
          _
      $region60: #{tpu_custom_call.1} parent=5 // pred_fallthru
        _
    $region6: #{tpu_custom_call.1} parent=1 // loop_footer
      %s22 = sadd.s32 1, %s18
    $region7: #{tpu_custom_call.1} parent=1 // loop_footer_branch
      %17 = sbr.rel target = $region3
    $region8: #{tpu_custom_call.1} parent=1 // loop_exit
      _
    %777 = vsyncpa [#allocation3], 1
    %s778 = scalar_lea.sflag [#allocation3], 1
    %779 = vsyncpa %s778, 1
    %780 = vsyncpa [#allocation6], 1
    %781 = vsyncpa [#allocation4], 1
    %s782 = scalar_lea.sflag [#allocation4], 1
    %783 = vsyncpa %s782, 1

</llo_original>
